<compile_context>
chip_gen: v6e
topology: v6e:2x2x1
jax: 0.10.0
libtpu: 0.0.40
codegen_flags: <defaults>
</compile_context>

<pallas_src>
import jax
import jax.numpy as jnp
from jax.experimental import pallas as pl
from jax.experimental.pallas import tpu as pltpu

EPS = 1e-5
KH = KW = 3


def _fused_conv_bn_kernel(x_ref, w_ref, g_ref, be_ref, out_ref):
    # x_ref  : (KH*KW*C, N*H*W)  kh/kw pre-shifted taps, N folded into lanes
    # w_ref  : (Cout, KH*KW*C)   packed weights, lane index = kh*(KW*C)+kw*C+c
    # g_ref  : (Cout, 1)         gamma1 + gamma2
    # be_ref : (Cout, 1)         beta1 + beta2
    # out_ref: (Cout, N*H*W)     lane-dense; reshaped/transposed to NCHW outside

    # conv1(x1) + conv2(x2) for all images at once: one K=54 MXU dot.
    # Conv biases omitted: a per-channel constant cancels exactly inside
    # training-mode BatchNorm (batch statistics).
    v3 = jnp.dot(w_ref[...], x_ref[...],
                 preferred_element_type=jnp.float32)           # (Cout, N*H*W)

    # BatchNorm2d (training mode): per-channel stats over N,H,W == one lane
    # reduce per channel. Single-pass E[x^2] - mean^2 variance keeps vreg
    # pressure low (no centered copy of v3 kept live).
    inv_cnt = 1.0 / v3.shape[-1]
    mean = jnp.sum(v3, axis=1, keepdims=True) * inv_cnt        # (Cout, 1)
    ex2 = jnp.sum(v3 * v3, axis=1, keepdims=True) * inv_cnt    # (Cout, 1)
    var = ex2 - mean * mean
    inv_std = jax.lax.rsqrt(var + EPS)

    # bn1(v3) + bn2(v3) == (g1+g2)*xhat + (b1+b2): one FMA pass with the mean
    # folded into the shift, so v3 is the only large live value.
    scale = g_ref[...] * inv_std                               # (Cout, 1)
    shift = be_ref[...] - mean * scale                         # (Cout, 1)
    out_ref[...] = v3 * scale + shift


def model_forward(params, x1_nchw, x2_nchw, x3_nchw=None, x4_nchw=None):
    # x3/x4 accepted to mirror the PyTorch signature but unused by forward.
    del x3_nchw, x4_nchw
    x1 = x1_nchw.astype(jnp.float32)
    x2 = x2_nchw.astype(jnp.float32)
    N, Cin, H, W = x1.shape
    Cout = params["w1"].shape[-1]
    C = 2 * Cin
    P = H * W

    # Fuse conv1+conv2: concatenate inputs along channels.
    x = jnp.concatenate([x1, x2], axis=1)                      # (N, C, H, W)
    xp = jnp.pad(x, ((0, 0), (0, 0), (1, 1), (1, 1)))          # padding=1

    # Pre-shift BOTH kh and kw taps in the wrapper (kernel needs no slicing),
    # then fold N into the lane axis so the kernel is a single big dot.
    taps = [xp[:, :, kh:kh + H, kw:kw + W]                     # each (N,C,H,W)
            for kh in range(KH) for kw in range(KW)]
    x_big = jnp.concatenate(taps, axis=1)                      # (N, 9*C, H, W)
    x_big = jnp.transpose(x_big, (1, 0, 2, 3)).reshape(KH * KW * C, N * P)

    # Packed weights: (Cout, KH*KW*C), row-major over (kh, kw, c) to match the
    # tap ordering above.
    w_comb = jnp.concatenate([params["w1"], params["w2"]], axis=2)  # (3,3,C,Co)
    w_packed = w_comb.reshape(KH * KW * C, Cout).T                  # (Cout, 54)

    # bn1 + bn2 share the same normalized input -> fold the affines.
    g = (params["gamma1"] + params["gamma2"]).reshape(Cout, 1)
    be = (params["beta1"] + params["beta2"]).reshape(Cout, 1)

    vmem = pl.BlockSpec(memory_space=pltpu.MemorySpace.VMEM)
    out = pl.pallas_call(
        _fused_conv_bn_kernel,
        out_shape=jax.ShapeDtypeStruct((Cout, N * P), jnp.float32),
        in_specs=[vmem] * 4,
        out_specs=vmem,
    )(x_big, w_packed, g, be)

    # (Cout, N*H*W) -> NCHW: one cheap XLA transpose.
    return jnp.transpose(out.reshape(Cout, N, H, W), (1, 0, 2, 3))


def init_params(key, cin=3, cout=8):
    k1, k2, k3, k4 = jax.random.split(key, 4)
    scale = 0.1
    return {
        # conv weights stored as (KH, KW, Cin, Cout)
        "w1": scale * jax.random.normal(k1, (KH, KW, cin, cout), jnp.float32),
        "b1": scale * jax.random.normal(k2, (1, cout), jnp.float32),
        "w2": scale * jax.random.normal(k3, (KH, KW, cin, cout), jnp.float32),
        "b2": scale * jax.random.normal(k4, (1, cout), jnp.float32),
        # BatchNorm affine params: PyTorch default init (weight=1, bias=0)
        "gamma1": jnp.ones((1, cout), jnp.float32),
        "beta1": jnp.zeros((1, cout), jnp.float32),
        "gamma2": jnp.ones((1, cout), jnp.float32),
        "beta2": jnp.zeros((1, cout), jnp.float32),
    }
    # TODO(synk): conv3/conv4/bn3 from __init__ are never used in forward; omitted.


def _reference(params, x1_nchw, x2_nchw):
    # Pure-JAX reference (mirrors the PyTorch forward, including conv biases).
    def conv(x, w_hwio, b):
        w_oihw = jnp.transpose(w_hwio, (3, 2, 0, 1))
        y = jax.lax.conv_general_dilated(
            x, w_oihw, window_strides=(1, 1), padding=((1, 1), (1, 1)),
            dimension_numbers=("NCHW", "OIHW", "NCHW"))
        return y + b.reshape(1, -1, 1, 1)

    v3 = conv(x1_nchw, params["w1"], params["b1"]) + \
         conv(x2_nchw, params["w2"], params["b2"])
    mean = jnp.mean(v3, axis=(0, 2, 3), keepdims=True)
    var = jnp.mean((v3 - mean) ** 2, axis=(0, 2, 3), keepdims=True)
    xhat = (v3 - mean) * jax.lax.rsqrt(var + EPS)
    g1 = params["gamma1"].reshape(1, -1, 1, 1)
    b1 = params["beta1"].reshape(1, -1, 1, 1)
    g2 = params["gamma2"].reshape(1, -1, 1, 1)
    b2 = params["beta2"].reshape(1, -1, 1, 1)
    return (g1 * xhat + b1) + (g2 * xhat + b2)


if __name__ == "__main__":
    key = jax.random.PRNGKey(0)
    kp, kx1, kx2, kx3, kx4 = jax.random.split(key, 5)
    params = init_params(kp)

    N, C, S = 4, 3, 32  # shapes from the module spec
    x1 = jax.random.normal(kx1, (N, C, S, S), jnp.float32)
    x2 = jax.random.normal(kx2, (N, C, S, S), jnp.float32)
    x3 = jax.random.normal(kx3, (N, C, S, S), jnp.float32)  # unused by forward
    x4 = jax.random.normal(kx4, (N, C, S, S), jnp.float32)  # unused by forward

    fwd = jax.jit(model_forward)
    out = jax.block_until_ready(fwd(params, x1, x2, x3, x4))

    ref = jax.block_until_ready(_reference(params, x1, x2))
    assert out.shape == (N, 8, S, S), out.shape
    assert jnp.allclose(out, ref, atol=1e-4, rtol=1e-4), \
        float(jnp.max(jnp.abs(out - ref)))

    print("KERNEL_OK")
</pallas_src>

<mosaic_0001>
module attributes {stable_mosaic.version = 11 : i64} {
  func.func @_fused_conv_bn_kernel(%arg0: memref<54x4096xf32, #tpu.memory_space<vmem>>, %arg1: memref<8x54xf32, #tpu.memory_space<vmem>>, %arg2: memref<8x1xf32, #tpu.memory_space<vmem>>, %arg3: memref<8x1xf32, #tpu.memory_space<vmem>>, %arg4: memref<8x4096xf32, #tpu.memory_space<vmem>>) attributes {dimension_semantics = [], scalar_prefetch = 0 : i64, scratch_operands = 0 : i64, tpu.core_type = #tpu.core_type<tc>} {
    %c0 = arith.constant 0 : index
    %c0_0 = arith.constant 0 : index
    %0 = vector.load %arg1[%c0, %c0_0] : memref<8x54xf32, #tpu.memory_space<vmem>>, vector<8x54xf32>
    %c0_1 = arith.constant 0 : index
    %c0_2 = arith.constant 0 : index
    %1 = vector.load %arg0[%c0_1, %c0_2] : memref<54x4096xf32, #tpu.memory_space<vmem>>, vector<54x4096xf32>
    %cst = arith.constant dense<0.000000e+00> : vector<8x4096xf32>
    %2 = tpu.matmul %0, %1, %cst {dimension_numbers = #tpu.dot_dimension_numbers<[1], [0], [0], [1], [0, 0, 1, 1], [], []>} : vector<8x54xf32>, vector<54x4096xf32>, vector<8x4096xf32> -> vector<8x4096xf32>
    %cst_3 = arith.constant dense<0.000000e+00> : vector<8xf32>
    %3 = vector.multi_reduction <add>, %2, %cst_3 [1] : vector<8x4096xf32> to vector<8xf32>
    %4 = vector.shape_cast %3 : vector<8xf32> to vector<8x1xf32>
    %cst_4 = arith.constant 2.44140625E-4 : f32
    %5 = vector.broadcast %cst_4 : f32 to vector<8x1xf32>
    %6 = arith.mulf %4, %5 : vector<8x1xf32>
    %7 = arith.mulf %2, %2 : vector<8x4096xf32>
    %cst_5 = arith.constant dense<0.000000e+00> : vector<8xf32>
    %8 = vector.multi_reduction <add>, %7, %cst_5 [1] : vector<8x4096xf32> to vector<8xf32>
    %9 = vector.shape_cast %8 : vector<8xf32> to vector<8x1xf32>
    %cst_6 = arith.constant 2.44140625E-4 : f32
    %10 = vector.broadcast %cst_6 : f32 to vector<8x1xf32>
    %11 = arith.mulf %9, %10 : vector<8x1xf32>
    %12 = arith.mulf %6, %6 : vector<8x1xf32>
    %13 = arith.subf %11, %12 : vector<8x1xf32>
    %cst_7 = arith.constant 9.99999974E-6 : f32
    %14 = vector.broadcast %cst_7 : f32 to vector<8x1xf32>
    %15 = arith.addf %13, %14 : vector<8x1xf32>
    %16 = math.rsqrt %15 : vector<8x1xf32>
    %c0_8 = arith.constant 0 : index
    %c0_9 = arith.constant 0 : index
    %17 = vector.load %arg2[%c0_8, %c0_9] : memref<8x1xf32, #tpu.memory_space<vmem>>, vector<8x1xf32>
    %18 = arith.mulf %17, %16 : vector<8x1xf32>
    %c0_10 = arith.constant 0 : index
    %c0_11 = arith.constant 0 : index
    %19 = vector.load %arg3[%c0_10, %c0_11] : memref<8x1xf32, #tpu.memory_space<vmem>>, vector<8x1xf32>
    %20 = arith.mulf %6, %18 : vector<8x1xf32>
    %21 = arith.subf %19, %20 : vector<8x1xf32>
    %22 = vector.broadcast %18 : vector<8x1xf32> to vector<8x4096xf32>
    %23 = arith.mulf %2, %22 : vector<8x4096xf32>
    %24 = vector.broadcast %21 : vector<8x1xf32> to vector<8x4096xf32>
    %25 = arith.addf %23, %24 : vector<8x4096xf32>
    %c0_12 = arith.constant 0 : index
    %c0_13 = arith.constant 0 : index
    %26 = vector.load %arg4[%c0_12, %c0_13] : memref<8x4096xf32, #tpu.memory_space<vmem>>, vector<8x4096xf32>
    tpu.vector_store %arg4[%c0_12, %c0_13], %25 {strides = array<i32>} : memref<8x4096xf32, #tpu.memory_space<vmem>>, vector<8x4096xf32>,
    return
  }
}

</mosaic_0001>

<llo_original>
// kernel: model_forward.1
$region0: #{model_forward.1}
  #allocation0 [shape = 'u32[]', space=smem, size = 0x4, offset = 0x4, fixed_abs, tag = 'smem constant byte address 0x4 - core index']
  #allocation1 [shape = 'u32[144,128]{1,0:T(1,128)}', space=vmem, size = 0x12000, scoped, tag = 'internal scratch']
  %s0 = inlined_call_operand.vmem [shape: f32[54,4096], index: 0, kind: input, shape index: {}]
  %s1 = inlined_call_operand.vmem [shape: f32[8,54], index: 1, kind: input, shape index: {}]
  %s2 = inlined_call_operand.vmem [shape: f32[8,1], index: 2, kind: input, shape index: {}]
  %s3 = inlined_call_operand.vmem [shape: f32[8,1], index: 3, kind: input, shape index: {}]
  %s4 = inlined_call_operand.vmem [shape: f32[8,4096], index: 4, kind: output, shape index: {}]
  %s5 = sld [smem:[#allocation0]]
  $region26: #{model_forward.1} parent=0
    _
  %s7 = ssub.s32 1, %s5
  %s8 = scalar_select 0, %s7, %s5
  // Predicated region
  $region2: #{model_forward.1} parent=0 // pred_check
    _
  $region3: #{model_forward.1} parent=0 // pred_check_branch
    %10 = sbr.rel (0) target = $region5
  $region4: #{model_forward.1} parent=0 // pred_region
    _
  $region5: #{model_forward.1} parent=0 // pred_fallthru
    _
  // Predicated region
  $region6: #{model_forward.1} parent=0 // pred_check
    _
  $region7: #{model_forward.1} parent=0 // pred_check_branch
    %12 = sbr.rel (0) target = $region9
  $region8: #{model_forward.1} parent=0 // pred_region
    _
  $region9: #{model_forward.1} parent=0 // pred_fallthru
    _
  // Predicated region
  $region10: #{model_forward.1} parent=0 // pred_check
    _
  $region11: #{model_forward.1} parent=0 // pred_check_branch
    %14 = sbr.rel (0) target = $region13
  $region12: #{model_forward.1} parent=0 // pred_region
    _
  $region13: #{model_forward.1} parent=0 // pred_fallthru
    _
  // Predicated region
  $region14: #{model_forward.1} parent=0 // pred_check
    _
  $region15: #{model_forward.1} parent=0 // pred_check_branch
    %16 = sbr.rel (0) target = $region17
  $region16: #{model_forward.1} parent=0 // pred_region
    _
  $region17: #{model_forward.1} parent=0 // pred_fallthru
    _
  %v17 = vld [vmem:[%s1] sm:$0xff]
  %v18 = vld [vmem:[%s0] sm:$0xff]
  %v19 = vld [vmem:[%s0 + $0x8] sm:$0xff]
  %v20 = vld [vmem:[%s0 + $0x10] sm:$0xff]
  %v21 = vld [vmem:[%s0 + $0x18] sm:$0xff]
  %v22 = vld [vmem:[%s0 + $0x20] sm:$0xff]
  %v23 = vld [vmem:[%s0 + $0x28] sm:$0xff]
  %v24 = vld [vmem:[%s0 + $0x30] sm:$0xff]
  %v25 = vld [vmem:[%s0 + $0x38] sm:$0xff]
  %v26 = vld [vmem:[%s0 + $0x40] sm:$0xff]
  %v27 = vld [vmem:[%s0 + $0x48] sm:$0xff]
  %v28 = vld [vmem:[%s0 + $0x50] sm:$0xff]
  %v29 = vld [vmem:[%s0 + $0x58] sm:$0xff]
  %v30 = vld [vmem:[%s0 + $0x60] sm:$0xff]
  %v31 = vld [vmem:[%s0 + $0x68] sm:$0xff]
  %v32 = vld [vmem:[%s0 + $0x70] sm:$0xff]
  %v33 = vld [vmem:[%s0 + $0x78] sm:$0xff]
  %v34 = vld [vmem:[%s0 + $0x80] sm:$0xff]
  %v35 = vld [vmem:[%s0 + $0x88] sm:$0xff]
  %v36 = vld [vmem:[%s0 + $0x90] sm:$0xff]
  %v37 = vld [vmem:[%s0 + $0x98] sm:$0xff]
  %v38 = vld [vmem:[%s0 + $0xa0] sm:$0xff]
  %v39 = vld [vmem:[%s0 + $0xa8] sm:$0xff]
  %v40 = vld [vmem:[%s0 + $0xb0] sm:$0xff]
  %v41 = vld [vmem:[%s0 + $0xb8] sm:$0xff]
  %v42 = vld [vmem:[%s0 + $0xc0] sm:$0xff]
  %v43 = vld [vmem:[%s0 + $0xc8] sm:$0xff]
  %v44 = vld [vmem:[%s0 + $0xd0] sm:$0xff]
  %v45 = vld [vmem:[%s0 + $0xd8] sm:$0xff]
  %v46 = vld [vmem:[%s0 + $0xe0] sm:$0xff]
  %v47 = vld [vmem:[%s0 + $0xe8] sm:$0xff]
  %v48 = vld [vmem:[%s0 + $0xf0] sm:$0xff]
  %v49 = vld [vmem:[%s0 + $0xf8] sm:$0xff]
  %v50 = vld [vmem:[%s0 + $0x100] sm:$0xff]
  %v51 = vld [vmem:[%s0 + $0x108] sm:$0xff]
  %v52 = vld [vmem:[%s0 + $0x110] sm:$0xff]
  %v53 = vld [vmem:[%s0 + $0x118] sm:$0xff]
  %v54 = vld [vmem:[%s0 + $0x120] sm:$0xff]
  %v55 = vld [vmem:[%s0 + $0x128] sm:$0xff]
  %v56 = vld [vmem:[%s0 + $0x130] sm:$0xff]
  %v57 = vld [vmem:[%s0 + $0x138] sm:$0xff]
  %v58 = vld [vmem:[%s0 + $0x140] sm:$0xff]
  %v59 = vld [vmem:[%s0 + $0x148] sm:$0xff]
  %v60 = vld [vmem:[%s0 + $0x150] sm:$0xff]
  %v61 = vld [vmem:[%s0 + $0x158] sm:$0xff]
  %v62 = vld [vmem:[%s0 + $0x160] sm:$0xff]
  %v63 = vld [vmem:[%s0 + $0x168] sm:$0xff]
  %v64 = vld [vmem:[%s0 + $0x170] sm:$0xff]
  %v65 = vld [vmem:[%s0 + $0x178] sm:$0xff]
  %v66 = vld [vmem:[%s0 + $0x180] sm:$0xff]
  %v67 = vld [vmem:[%s0 + $0x188] sm:$0xff]
  %v68 = vld [vmem:[%s0 + $0x190] sm:$0xff]
  %v69 = vld [vmem:[%s0 + $0x198] sm:$0xff]
  %v70 = vld [vmem:[%s0 + $0x1a0] sm:$0xff]
  %v71 = vld [vmem:[%s0 + $0x1a8] sm:$0xff]
  %v72 = vld [vmem:[%s0 + $0x1b0] sm:$0xff]
  %v73 = vld [vmem:[%s0 + $0x1b8] sm:$0xff]
  %v74 = vld [vmem:[%s0 + $0x1c0] sm:$0xff]
  %v75 = vld [vmem:[%s0 + $0x1c8] sm:$0xff]
  %v76 = vld [vmem:[%s0 + $0x1d0] sm:$0xff]
  %v77 = vld [vmem:[%s0 + $0x1d8] sm:$0xff]
  %v78 = vld [vmem:[%s0 + $0x1e0] sm:$0xff]
  %v79 = vld [vmem:[%s0 + $0x1e8] sm:$0xff]
  %v80 = vld [vmem:[%s0 + $0x1f0] sm:$0xff]
  %v81 = vld [vmem:[%s0 + $0x1f8] sm:$0xff]
  %v82 = vld [vmem:[%s0 + $0x200] sm:$0xff]
  %v83 = vld [vmem:[%s0 + $0x208] sm:$0xff]
  %v84 = vld [vmem:[%s0 + $0x210] sm:$0xff]
  %v85 = vld [vmem:[%s0 + $0x218] sm:$0xff]
  %v86 = vld [vmem:[%s0 + $0x220] sm:$0xff]
  %v87 = vld [vmem:[%s0 + $0x228] sm:$0xff]
  %v88 = vld [vmem:[%s0 + $0x230] sm:$0xff]
  %v89 = vld [vmem:[%s0 + $0x238] sm:$0xff]
  %v90 = vld [vmem:[%s0 + $0x240] sm:$0xff]
  %v91 = vld [vmem:[%s0 + $0x248] sm:$0xff]
  %v92 = vld [vmem:[%s0 + $0x250] sm:$0xff]
  %v93 = vld [vmem:[%s0 + $0x258] sm:$0xff]
  %v94 = vld [vmem:[%s0 + $0x260] sm:$0xff]
  %v95 = vld [vmem:[%s0 + $0x268] sm:$0xff]
  %v96 = vld [vmem:[%s0 + $0x270] sm:$0xff]
  %v97 = vld [vmem:[%s0 + $0x278] sm:$0xff]
  %v98 = vld [vmem:[%s0 + $0x280] sm:$0xff]
  %v99 = vld [vmem:[%s0 + $0x288] sm:$0xff]
  %v100 = vld [vmem:[%s0 + $0x290] sm:$0xff]
  %v101 = vld [vmem:[%s0 + $0x298] sm:$0xff]
  %v102 = vld [vmem:[%s0 + $0x2a0] sm:$0xff]
  %v103 = vld [vmem:[%s0 + $0x2a8] sm:$0xff]
  %v104 = vld [vmem:[%s0 + $0x2b0] sm:$0xff]
  %v105 = vld [vmem:[%s0 + $0x2b8] sm:$0xff]
  %v106 = vld [vmem:[%s0 + $0x2c0] sm:$0xff]
  %v107 = vld [vmem:[%s0 + $0x2c8] sm:$0xff]
  %v108 = vld [vmem:[%s0 + $0x2d0] sm:$0xff]
  %v109 = vld [vmem:[%s0 + $0x2d8] sm:$0xff]
  %v110 = vld [vmem:[%s0 + $0x2e0] sm:$0xff]
  %v111 = vld [vmem:[%s0 + $0x2e8] sm:$0xff]
  %v112 = vld [vmem:[%s0 + $0x2f0] sm:$0xff]
  %v113 = vld [vmem:[%s0 + $0x2f8] sm:$0xff]
  %v114 = vld [vmem:[%s0 + $0x300] sm:$0xff]
  %v115 = vld [vmem:[%s0 + $0x308] sm:$0xff]
  %v116 = vld [vmem:[%s0 + $0x310] sm:$0xff]
  %v117 = vld [vmem:[%s0 + $0x318] sm:$0xff]
  %v118 = vld [vmem:[%s0 + $0x320] sm:$0xff]
  %v119 = vld [vmem:[%s0 + $0x328] sm:$0xff]
  %v120 = vld [vmem:[%s0 + $0x330] sm:$0xff]
  %v121 = vld [vmem:[%s0 + $0x338] sm:$0xff]
  %v122 = vld [vmem:[%s0 + $0x340] sm:$0xff]
  %v123 = vld [vmem:[%s0 + $0x348] sm:$0xff]
  %v124 = vld [vmem:[%s0 + $0x350] sm:$0xff]
  %v125 = vld [vmem:[%s0 + $0x358] sm:$0xff]
  %v126 = vld [vmem:[%s0 + $0x360] sm:$0xff]
  %v127 = vld [vmem:[%s0 + $0x368] sm:$0xff]
  %v128 = vld [vmem:[%s0 + $0x370] sm:$0xff]
  %v129 = vld [vmem:[%s0 + $0x378] sm:$0xff]
  %v130 = vld [vmem:[%s0 + $0x380] sm:$0xff]
  %v131 = vld [vmem:[%s0 + $0x388] sm:$0xff]
  %v132 = vld [vmem:[%s0 + $0x390] sm:$0xff]
  %v133 = vld [vmem:[%s0 + $0x398] sm:$0xff]
  %v134 = vld [vmem:[%s0 + $0x3a0] sm:$0xff]
  %v135 = vld [vmem:[%s0 + $0x3a8] sm:$0xff]
  %v136 = vld [vmem:[%s0 + $0x3b0] sm:$0xff]
  %v137 = vld [vmem:[%s0 + $0x3b8] sm:$0xff]
  %v138 = vld [vmem:[%s0 + $0x3c0] sm:$0xff]
  %v139 = vld [vmem:[%s0 + $0x3c8] sm:$0xff]
  %v140 = vld [vmem:[%s0 + $0x3d0] sm:$0xff]
  %v141 = vld [vmem:[%s0 + $0x3d8] sm:$0xff]
  %v142 = vld [vmem:[%s0 + $0x3e0] sm:$0xff]
  %v143 = vld [vmem:[%s0 + $0x3e8] sm:$0xff]
  %v144 = vld [vmem:[%s0 + $0x3f0] sm:$0xff]
  %v145 = vld [vmem:[%s0 + $0x3f8] sm:$0xff]
  %v146 = vld [vmem:[%s0 + $0x400] sm:$0xff]
  %v147 = vld [vmem:[%s0 + $0x408] sm:$0xff]
  %v148 = vld [vmem:[%s0 + $0x410] sm:$0xff]
  %v149 = vld [vmem:[%s0 + $0x418] sm:$0xff]
  %v150 = vld [vmem:[%s0 + $0x420] sm:$0xff]
  %v151 = vld [vmem:[%s0 + $0x428] sm:$0xff]
  %v152 = vld [vmem:[%s0 + $0x430] sm:$0xff]
  %v153 = vld [vmem:[%s0 + $0x438] sm:$0xff]
  %v154 = vld [vmem:[%s0 + $0x440] sm:$0xff]
  %v155 = vld [vmem:[%s0 + $0x448] sm:$0xff]
  %v156 = vld [vmem:[%s0 + $0x450] sm:$0xff]
  %v157 = vld [vmem:[%s0 + $0x458] sm:$0xff]
  %v158 = vld [vmem:[%s0 + $0x460] sm:$0xff]
  %v159 = vld [vmem:[%s0 + $0x468] sm:$0xff]
  %v160 = vld [vmem:[%s0 + $0x470] sm:$0xff]
  %v161 = vld [vmem:[%s0 + $0x478] sm:$0xff]
  %v162 = vld [vmem:[%s0 + $0x480] sm:$0xff]
  %v163 = vld [vmem:[%s0 + $0x488] sm:$0xff]
  %v164 = vld [vmem:[%s0 + $0x490] sm:$0xff]
  %v165 = vld [vmem:[%s0 + $0x498] sm:$0xff]
  %v166 = vld [vmem:[%s0 + $0x4a0] sm:$0xff]
  %v167 = vld [vmem:[%s0 + $0x4a8] sm:$0xff]
  %v168 = vld [vmem:[%s0 + $0x4b0] sm:$0xff]
  %v169 = vld [vmem:[%s0 + $0x4b8] sm:$0xff]
  %v170 = vld [vmem:[%s0 + $0x4c0] sm:$0xff]
  %v171 = vld [vmem:[%s0 + $0x4c8] sm:$0xff]
  %v172 = vld [vmem:[%s0 + $0x4d0] sm:$0xff]
  %v173 = vld [vmem:[%s0 + $0x4d8] sm:$0xff]
  %v174 = vld [vmem:[%s0 + $0x4e0] sm:$0xff]
  %v175 = vld [vmem:[%s0 + $0x4e8] sm:$0xff]
  %v176 = vld [vmem:[%s0 + $0x4f0] sm:$0xff]
  %v177 = vld [vmem:[%s0 + $0x4f8] sm:$0xff]
  %v178 = vld [vmem:[%s0 + $0x500] sm:$0xff]
  %v179 = vld [vmem:[%s0 + $0x508] sm:$0xff]
  %v180 = vld [vmem:[%s0 + $0x510] sm:$0xff]
  %v181 = vld [vmem:[%s0 + $0x518] sm:$0xff]
  %v182 = vld [vmem:[%s0 + $0x520] sm:$0xff]
  %v183 = vld [vmem:[%s0 + $0x528] sm:$0xff]
  %v184 = vld [vmem:[%s0 + $0x530] sm:$0xff]
  %v185 = vld [vmem:[%s0 + $0x538] sm:$0xff]
  %v186 = vld [vmem:[%s0 + $0x540] sm:$0xff]
  %v187 = vld [vmem:[%s0 + $0x548] sm:$0xff]
  %v188 = vld [vmem:[%s0 + $0x550] sm:$0xff]
  %v189 = vld [vmem:[%s0 + $0x558] sm:$0xff]
  %v190 = vld [vmem:[%s0 + $0x560] sm:$0xff]
  %v191 = vld [vmem:[%s0 + $0x568] sm:$0xff]
  %v192 = vld [vmem:[%s0 + $0x570] sm:$0xff]
  %v193 = vld [vmem:[%s0 + $0x578] sm:$0xff]
  %v194 = vld [vmem:[%s0 + $0x580] sm:$0xff]
  %v195 = vld [vmem:[%s0 + $0x588] sm:$0xff]
  %v196 = vld [vmem:[%s0 + $0x590] sm:$0xff]
  %v197 = vld [vmem:[%s0 + $0x598] sm:$0xff]
  %v198 = vld [vmem:[%s0 + $0x5a0] sm:$0xff]
  %v199 = vld [vmem:[%s0 + $0x5a8] sm:$0xff]
  %v200 = vld [vmem:[%s0 + $0x5b0] sm:$0xff]
  %v201 = vld [vmem:[%s0 + $0x5b8] sm:$0xff]
  %v202 = vld [vmem:[%s0 + $0x5c0] sm:$0xff]
  %v203 = vld [vmem:[%s0 + $0x5c8] sm:$0xff]
  %v204 = vld [vmem:[%s0 + $0x5d0] sm:$0xff]
  %v205 = vld [vmem:[%s0 + $0x5d8] sm:$0xff]
  %v206 = vld [vmem:[%s0 + $0x5e0] sm:$0xff]
  %v207 = vld [vmem:[%s0 + $0x5e8] sm:$0xff]
  %v208 = vld [vmem:[%s0 + $0x5f0] sm:$0xff]
  %v209 = vld [vmem:[%s0 + $0x5f8] sm:$0xff]
  %v210 = vld [vmem:[%s0 + $0x600] sm:$0x3f]
  %v211 = vld [vmem:[%s0 + $0x608] sm:$0x3f]
  %v212 = vld [vmem:[%s0 + $0x610] sm:$0x3f]
  %v213 = vld [vmem:[%s0 + $0x618] sm:$0x3f]
  %v214 = vld [vmem:[%s0 + $0x620] sm:$0x3f]
  %v215 = vld [vmem:[%s0 + $0x628] sm:$0x3f]
  %v216 = vld [vmem:[%s0 + $0x630] sm:$0x3f]
  %v217 = vld [vmem:[%s0 + $0x638] sm:$0x3f]
  %v218 = vld [vmem:[%s0 + $0x640] sm:$0x3f]
  %v219 = vld [vmem:[%s0 + $0x648] sm:$0x3f]
  %v220 = vld [vmem:[%s0 + $0x650] sm:$0x3f]
  %v221 = vld [vmem:[%s0 + $0x658] sm:$0x3f]
  %v222 = vld [vmem:[%s0 + $0x660] sm:$0x3f]
  %v223 = vld [vmem:[%s0 + $0x668] sm:$0x3f]
  %v224 = vld [vmem:[%s0 + $0x670] sm:$0x3f]
  %v225 = vld [vmem:[%s0 + $0x678] sm:$0x3f]
  %v226 = vld [vmem:[%s0 + $0x680] sm:$0x3f]
  %v227 = vld [vmem:[%s0 + $0x688] sm:$0x3f]
  %v228 = vld [vmem:[%s0 + $0x690] sm:$0x3f]
  %v229 = vld [vmem:[%s0 + $0x698] sm:$0x3f]
  %v230 = vld [vmem:[%s0 + $0x6a0] sm:$0x3f]
  %v231 = vld [vmem:[%s0 + $0x6a8] sm:$0x3f]
  %v232 = vld [vmem:[%s0 + $0x6b0] sm:$0x3f]
  %v233 = vld [vmem:[%s0 + $0x6b8] sm:$0x3f]
  %v234 = vld [vmem:[%s0 + $0x6c0] sm:$0x3f]
  %v235 = vld [vmem:[%s0 + $0x6c8] sm:$0x3f]
  %v236 = vld [vmem:[%s0 + $0x6d0] sm:$0x3f]
  %v237 = vld [vmem:[%s0 + $0x6d8] sm:$0x3f]
  %v238 = vld [vmem:[%s0 + $0x6e0] sm:$0x3f]
  %v239 = vld [vmem:[%s0 + $0x6e8] sm:$0x3f]
  %v240 = vld [vmem:[%s0 + $0x6f0] sm:$0x3f]
  %v241 = vld [vmem:[%s0 + $0x6f8] sm:$0x3f]
  %vm242 = vcmask 441344
  %v244 = vsel %vm242, %v17, 0
  %vm246 = vcmask 1045504
  %v248 = vsel %vm246, %v210, 0
  %v251 = vsel %vm246, %v211, 0
  %v254 = vsel %vm246, %v212, 0
  %v257 = vsel %vm246, %v213, 0
  %v260 = vsel %vm246, %v214, 0
  %v263 = vsel %vm246, %v215, 0
  %v266 = vsel %vm246, %v216, 0
  %v269 = vsel %vm246, %v217, 0
  %v272 = vsel %vm246, %v218, 0
  %v275 = vsel %vm246, %v219, 0
  %v278 = vsel %vm246, %v220, 0
  %v281 = vsel %vm246, %v221, 0
  %v284 = vsel %vm246, %v222, 0
  %v287 = vsel %vm246, %v223, 0
  %v290 = vsel %vm246, %v224, 0
  %v293 = vsel %vm246, %v225, 0
  %v296 = vsel %vm246, %v226, 0
  %v299 = vsel %vm246, %v227, 0
  %v302 = vsel %vm246, %v228, 0
  %v305 = vsel %vm246, %v229, 0
  %v308 = vsel %vm246, %v230, 0
  %v311 = vsel %vm246, %v231, 0
  %v314 = vsel %vm246, %v232, 0
  %v317 = vsel %vm246, %v233, 0
  %v320 = vsel %vm246, %v234, 0
  %v323 = vsel %vm246, %v235, 0
  %v326 = vsel %vm246, %v236, 0
  %v329 = vsel %vm246, %v237, 0
  %v332 = vsel %vm246, %v238, 0
  %v335 = vsel %vm246, %v239, 0
  %v338 = vsel %vm246, %v240, 0
  %v341 = vsel %vm246, %v241, 0
  %343 = vmatprep.subr.mxu0 0.0
  %344 = vmatpush1.msra.mxu0 0.0
  %345 = vmatprep.subr.mxu0 0.0
  %346 = vmatpush1.msra.mxu0 0.0
  %347 = vmatprep.subr.mxu0 0.0
  %348 = vmatpush1.msra.mxu0 0.0
  %349 = vmatprep.subr.mxu0 0.0
  %350 = vmatpush1.msra.mxu0 0.0
  %351 = vmatprep.subr.mxu0 0.0
  %352 = vmatpush1.msra.mxu0 0.0
  %353 = vmatprep.subr.mxu0 0.0
  %354 = vmatpush1.msra.mxu0 0.0
  %355 = vmatprep.subr.mxu0 0.0
  %356 = vmatpush1.msra.mxu0 0.0
  %357 = vmatprep.subr.mxu0 0.0
  %358 = vmatpush1.msra.mxu0 0.0
  %359 = vmatprep.subr.mxu0 0.0
  %360 = vmatpush1.msra.mxu0 0.0
  %361 = vmatprep.subr.mxu0 %v251
  %362 = vmatpush1.msra.mxu0 %v248
  %363 = vmatprep.subr.mxu0 %v179
  %364 = vmatpush1.msra.mxu0 %v178
  %365 = vmatprep.subr.mxu0 %v147
  %366 = vmatpush1.msra.mxu0 %v146
  %367 = vmatprep.subr.mxu0 %v115
  %368 = vmatpush1.msra.mxu0 %v114
  %369 = vmatprep.subr.mxu0 %v83
  %370 = vmatpush1.msra.mxu0 %v82
  %371 = vmatprep.subr.mxu0 %v51
  %372 = vmatpush1.msra.mxu0 %v50
  %373 = vmatprep.subr.mxu0 %v19
  %374 = vmatpush1.msra.mxu0 %v18
  %375 = vmatprep.subr.mxu0 0.0
  %376 = vmatpush2.msra.mxu0 0.0
  %377 = vmatprep.subr.mxu0 0.0
  %378 = vmatpush2.msra.mxu0 0.0
  %379 = vmatprep.subr.mxu0 0.0
  %380 = vmatpush2.msra.mxu0 0.0
  %381 = vmatprep.subr.mxu0 0.0
  %382 = vmatpush2.msra.mxu0 0.0
  %383 = vmatprep.subr.mxu0 0.0
  %384 = vmatpush2.msra.mxu0 0.0
  %385 = vmatprep.subr.mxu0 0.0
  %386 = vmatpush2.msra.mxu0 0.0
  %387 = vmatprep.subr.mxu0 0.0
  %388 = vmatpush2.msra.mxu0 0.0
  %389 = vmatprep.subr.mxu0 0.0
  %390 = vmatpush2.msra.mxu0 0.0
  %391 = vmatprep.subr.mxu0 0.0
  %392 = vmatpush2.msra.mxu0 0.0
  %393 = vmatprep.subr.mxu0 0.0
  %394 = vmatpush2.msra.mxu0 0.0
  %395 = vmatprep.subr.mxu0 0.0
  %396 = vmatpush2.msra.mxu0 0.0
  %397 = vmatprep.subr.mxu0 0.0
  %398 = vmatpush2.msra.mxu0 0.0
  %399 = vmatprep.subr.mxu0 0.0
  %400 = vmatpush2.msra.mxu0 0.0
  %401 = vmatprep.subr.mxu0 0.0
  %402 = vmatpush2.msra.mxu0 0.0
  %403 = vmatprep.subr.mxu0 0.0
  %404 = vmatpush2.msra.mxu0 0.0
  %405 = vmatprep.subr.mxu0 0.0
  %406 = vmatpush2.msra.mxu0 0.0
  %407 = vmatprep.mubr.f32.mxu0 0.0
  %408 = vmatmul.mubr.f32.gmra.mxu0 %v244
  %v409 = vpop.f32.mrf.mxu0
  %v410 = vadd.f32 0.0, %v409
  %v411 = vpop.f32.mrf.mxu0
  %v412 = vadd.f32 0.0, %v411
  %413 = vdwg.mxu0
  %414 = vmatprep.subr.mxu0 0.0
  %415 = vmatpush1.msra.mxu0 0.0
  %416 = vmatprep.subr.mxu0 0.0
  %417 = vmatpush1.msra.mxu0 0.0
  %418 = vmatprep.subr.mxu0 0.0
  %419 = vmatpush1.msra.mxu0 0.0
  %420 = vmatprep.subr.mxu0 0.0
  %421 = vmatpush1.msra.mxu0 0.0
  %422 = vmatprep.subr.mxu0 0.0
  %423 = vmatpush1.msra.mxu0 0.0
  %424 = vmatprep.subr.mxu0 0.0
  %425 = vmatpush1.msra.mxu0 0.0
  %426 = vmatprep.subr.mxu0 0.0
  %427 = vmatpush1.msra.mxu0 0.0
  %428 = vmatprep.subr.mxu0 0.0
  %429 = vmatpush1.msra.mxu0 0.0
  %430 = vmatprep.subr.mxu0 0.0
  %431 = vmatpush1.msra.mxu0 0.0
  %432 = vmatprep.subr.mxu0 %v257
  %433 = vmatpush1.msra.mxu0 %v254
  %434 = vmatprep.subr.mxu0 %v181
  %435 = vmatpush1.msra.mxu0 %v180
  %436 = vmatprep.subr.mxu0 %v149
  %437 = vmatpush1.msra.mxu0 %v148
  %438 = vmatprep.subr.mxu0 %v117
  %439 = vmatpush1.msra.mxu0 %v116
  %440 = vmatprep.subr.mxu0 %v85
  %441 = vmatpush1.msra.mxu0 %v84
  %442 = vmatprep.subr.mxu0 %v53
  %443 = vmatpush1.msra.mxu0 %v52
  %444 = vmatprep.subr.mxu0 %v21
  %445 = vmatpush1.msra.mxu0 %v20
  %446 = vmatprep.subr.mxu0 0.0
  %447 = vmatpush2.msra.mxu0 0.0
  %448 = vmatprep.subr.mxu0 0.0
  %449 = vmatpush2.msra.mxu0 0.0
  %450 = vmatprep.subr.mxu0 0.0
  %451 = vmatpush2.msra.mxu0 0.0
  %452 = vmatprep.subr.mxu0 0.0
  %453 = vmatpush2.msra.mxu0 0.0
  %454 = vmatprep.subr.mxu0 0.0
  %455 = vmatpush2.msra.mxu0 0.0
  %456 = vmatprep.subr.mxu0 0.0
  %457 = vmatpush2.msra.mxu0 0.0
  %458 = vmatprep.subr.mxu0 0.0
  %459 = vmatpush2.msra.mxu0 0.0
  %460 = vmatprep.subr.mxu0 0.0
  %461 = vmatpush2.msra.mxu0 0.0
  %462 = vmatprep.subr.mxu0 0.0
  %463 = vmatpush2.msra.mxu0 0.0
  %464 = vmatprep.subr.mxu0 0.0
  %465 = vmatpush2.msra.mxu0 0.0
  %466 = vmatprep.subr.mxu0 0.0
  %467 = vmatpush2.msra.mxu0 0.0
  %468 = vmatprep.subr.mxu0 0.0
  %469 = vmatpush2.msra.mxu0 0.0
  %470 = vmatprep.subr.mxu0 0.0
  %471 = vmatpush2.msra.mxu0 0.0
  %472 = vmatprep.subr.mxu0 0.0
  %473 = vmatpush2.msra.mxu0 0.0
  %474 = vmatprep.subr.mxu0 0.0
  %475 = vmatpush2.msra.mxu0 0.0
  %476 = vmatprep.subr.mxu0 0.0
  %477 = vmatpush2.msra.mxu0 0.0
  %478 = vmatprep.mubr.f32.mxu0 0.0
  %479 = vmatmul.mubr.f32.gmra.mxu0 %v244
  %v480 = vpop.f32.mrf.mxu0
  %v481 = vadd.f32 0.0, %v480
  %v482 = vpop.f32.mrf.mxu0
  %v483 = vadd.f32 0.0, %v482
  %484 = vdwg.mxu0
  %485 = vmatprep.subr.mxu0 0.0
  %486 = vmatpush1.msra.mxu0 0.0
  %487 = vmatprep.subr.mxu0 0.0
  %488 = vmatpush1.msra.mxu0 0.0
  %489 = vmatprep.subr.mxu0 0.0
  %490 = vmatpush1.msra.mxu0 0.0
  %491 = vmatprep.subr.mxu0 0.0
  %492 = vmatpush1.msra.mxu0 0.0
  %493 = vmatprep.subr.mxu0 0.0
  %494 = vmatpush1.msra.mxu0 0.0
  %495 = vmatprep.subr.mxu0 0.0
  %496 = vmatpush1.msra.mxu0 0.0
  %497 = vmatprep.subr.mxu0 0.0
  %498 = vmatpush1.msra.mxu0 0.0
  %499 = vmatprep.subr.mxu0 0.0
  %500 = vmatpush1.msra.mxu0 0.0
  %501 = vmatprep.subr.mxu0 0.0
  %502 = vmatpush1.msra.mxu0 0.0
  %503 = vmatprep.subr.mxu0 %v263
  %504 = vmatpush1.msra.mxu0 %v260
  %505 = vmatprep.subr.mxu0 %v183
  %506 = vmatpush1.msra.mxu0 %v182
  %507 = vmatprep.subr.mxu0 %v151
  %508 = vmatpush1.msra.mxu0 %v150
  %509 = vmatprep.subr.mxu0 %v119
  %510 = vmatpush1.msra.mxu0 %v118
  %511 = vmatprep.subr.mxu0 %v87
  %512 = vmatpush1.msra.mxu0 %v86
  %513 = vmatprep.subr.mxu0 %v55
  %514 = vmatpush1.msra.mxu0 %v54
  %515 = vmatprep.subr.mxu0 %v23
  %516 = vmatpush1.msra.mxu0 %v22
  %517 = vmatprep.subr.mxu0 0.0
  %518 = vmatpush2.msra.mxu0 0.0
  %519 = vmatprep.subr.mxu0 0.0
  %520 = vmatpush2.msra.mxu0 0.0
  %521 = vmatprep.subr.mxu0 0.0
  %522 = vmatpush2.msra.mxu0 0.0
  %523 = vmatprep.subr.mxu0 0.0
  %524 = vmatpush2.msra.mxu0 0.0
  %525 = vmatprep.subr.mxu0 0.0
  %526 = vmatpush2.msra.mxu0 0.0
  %527 = vmatprep.subr.mxu0 0.0
  %528 = vmatpush2.msra.mxu0 0.0
  %529 = vmatprep.subr.mxu0 0.0
  %530 = vmatpush2.msra.mxu0 0.0
  %531 = vmatprep.subr.mxu0 0.0
  %532 = vmatpush2.msra.mxu0 0.0
  %533 = vmatprep.subr.mxu0 0.0
  %534 = vmatpush2.msra.mxu0 0.0
  %535 = vmatprep.subr.mxu0 0.0
  %536 = vmatpush2.msra.mxu0 0.0
  %537 = vmatprep.subr.mxu0 0.0
  %538 = vmatpush2.msra.mxu0 0.0
  %539 = vmatprep.subr.mxu0 0.0
  %540 = vmatpush2.msra.mxu0 0.0
  %541 = vmatprep.subr.mxu0 0.0
  %542 = vmatpush2.msra.mxu0 0.0
  %543 = vmatprep.subr.mxu0 0.0
  %544 = vmatpush2.msra.mxu0 0.0
  %545 = vmatprep.subr.mxu0 0.0
  %546 = vmatpush2.msra.mxu0 0.0
  %547 = vmatprep.subr.mxu0 0.0
  %548 = vmatpush2.msra.mxu0 0.0
  %549 = vmatprep.mubr.f32.mxu0 0.0
  %550 = vmatmul.mubr.f32.gmra.mxu0 %v244
  %v551 = vpop.f32.mrf.mxu0
  %v552 = vadd.f32 0.0, %v551
  %v553 = vpop.f32.mrf.mxu0
  %v554 = vadd.f32 0.0, %v553
  %555 = vdwg.mxu0
  %556 = vmatprep.subr.mxu0 0.0
  %557 = vmatpush1.msra.mxu0 0.0
  %558 = vmatprep.subr.mxu0 0.0
  %559 = vmatpush1.msra.mxu0 0.0
  %560 = vmatprep.subr.mxu0 0.0
  %561 = vmatpush1.msra.mxu0 0.0
  %562 = vmatprep.subr.mxu0 0.0
  %563 = vmatpush1.msra.mxu0 0.0
  %564 = vmatprep.subr.mxu0 0.0
  %565 = vmatpush1.msra.mxu0 0.0
  %566 = vmatprep.subr.mxu0 0.0
  %567 = vmatpush1.msra.mxu0 0.0
  %568 = vmatprep.subr.mxu0 0.0
  %569 = vmatpush1.msra.mxu0 0.0
  %570 = vmatprep.subr.mxu0 0.0
  %571 = vmatpush1.msra.mxu0 0.0
  %572 = vmatprep.subr.mxu0 0.0
  %573 = vmatpush1.msra.mxu0 0.0
  %574 = vmatprep.subr.mxu0 %v269
  %575 = vmatpush1.msra.mxu0 %v266
  %576 = vmatprep.subr.mxu0 %v185
  %577 = vmatpush1.msra.mxu0 %v184
  %578 = vmatprep.subr.mxu0 %v153
  %579 = vmatpush1.msra.mxu0 %v152
  %580 = vmatprep.subr.mxu0 %v121
  %581 = vmatpush1.msra.mxu0 %v120
  %582 = vmatprep.subr.mxu0 %v89
  %583 = vmatpush1.msra.mxu0 %v88
  %584 = vmatprep.subr.mxu0 %v57
  %585 = vmatpush1.msra.mxu0 %v56
  %586 = vmatprep.subr.mxu0 %v25
  %587 = vmatpush1.msra.mxu0 %v24
  %588 = vmatprep.subr.mxu0 0.0
  %589 = vmatpush2.msra.mxu0 0.0
  %590 = vmatprep.subr.mxu0 0.0
  %591 = vmatpush2.msra.mxu0 0.0
  %592 = vmatprep.subr.mxu0 0.0
  %593 = vmatpush2.msra.mxu0 0.0
  %594 = vmatprep.subr.mxu0 0.0
  %595 = vmatpush2.msra.mxu0 0.0
  %596 = vmatprep.subr.mxu0 0.0
  %597 = vmatpush2.msra.mxu0 0.0
  %598 = vmatprep.subr.mxu0 0.0
  %599 = vmatpush2.msra.mxu0 0.0
  %600 = vmatprep.subr.mxu0 0.0
  %601 = vmatpush2.msra.mxu0 0.0
  %602 = vmatprep.subr.mxu0 0.0
  %603 = vmatpush2.msra.mxu0 0.0
  %604 = vmatprep.subr.mxu0 0.0
  %605 = vmatpush2.msra.mxu0 0.0
  %606 = vmatprep.subr.mxu0 0.0
  %607 = vmatpush2.msra.mxu0 0.0
  %608 = vmatprep.subr.mxu0 0.0
  %609 = vmatpush2.msra.mxu0 0.0
  %610 = vmatprep.subr.mxu0 0.0
  %611 = vmatpush2.msra.mxu0 0.0
  %612 = vmatprep.subr.mxu0 0.0
  %613 = vmatpush2.msra.mxu0 0.0
  %614 = vmatprep.subr.mxu0 0.0
  %615 = vmatpush2.msra.mxu0 0.0
  %616 = vmatprep.subr.mxu0 0.0
  %617 = vmatpush2.msra.mxu0 0.0
  %618 = vmatprep.subr.mxu0 0.0
  %619 = vmatpush2.msra.mxu0 0.0
  %620 = vmatprep.mubr.f32.mxu0 0.0
  %621 = vmatmul.mubr.f32.gmra.mxu0 %v244
  %v622 = vpop.f32.mrf.mxu0
  %v623 = vadd.f32 0.0, %v622
  %v624 = vpop.f32.mrf.mxu0
  %v625 = vadd.f32 0.0, %v624
  %626 = vdwg.mxu0
  %627 = vmatprep.subr.mxu0 0.0
  %628 = vmatpush1.msra.mxu0 0.0
  %629 = vmatprep.subr.mxu0 0.0
  %630 = vmatpush1.msra.mxu0 0.0
  %631 = vmatprep.subr.mxu0 0.0
  %632 = vmatpush1.msra.mxu0 0.0
  %633 = vmatprep.subr.mxu0 0.0
  %634 = vmatpush1.msra.mxu0 0.0
  %635 = vmatprep.subr.mxu0 0.0
  %636 = vmatpush1.msra.mxu0 0.0
  %637 = vmatprep.subr.mxu0 0.0
  %638 = vmatpush1.msra.mxu0 0.0
  %639 = vmatprep.subr.mxu0 0.0
  %640 = vmatpush1.msra.mxu0 0.0
  %641 = vmatprep.subr.mxu0 0.0
  %642 = vmatpush1.msra.mxu0 0.0
  %643 = vmatprep.subr.mxu0 0.0
  %644 = vmatpush1.msra.mxu0 0.0
  %645 = vmatprep.subr.mxu0 %v275
  %646 = vmatpush1.msra.mxu0 %v272
  %647 = vmatprep.subr.mxu0 %v187
  %648 = vmatpush1.msra.mxu0 %v186
  %649 = vmatprep.subr.mxu0 %v155
  %650 = vmatpush1.msra.mxu0 %v154
  %651 = vmatprep.subr.mxu0 %v123
  %652 = vmatpush1.msra.mxu0 %v122
  %653 = vmatprep.subr.mxu0 %v91
  %654 = vmatpush1.msra.mxu0 %v90
  %655 = vmatprep.subr.mxu0 %v59
  %656 = vmatpush1.msra.mxu0 %v58
  %657 = vmatprep.subr.mxu0 %v27
  %658 = vmatpush1.msra.mxu0 %v26
  %659 = vmatprep.subr.mxu0 0.0
  %660 = vmatpush2.msra.mxu0 0.0
  %661 = vmatprep.subr.mxu0 0.0
  %662 = vmatpush2.msra.mxu0 0.0
  %663 = vmatprep.subr.mxu0 0.0
  %664 = vmatpush2.msra.mxu0 0.0
  %665 = vmatprep.subr.mxu0 0.0
  %666 = vmatpush2.msra.mxu0 0.0
  %667 = vmatprep.subr.mxu0 0.0
  %668 = vmatpush2.msra.mxu0 0.0
  %669 = vmatprep.subr.mxu0 0.0
  %670 = vmatpush2.msra.mxu0 0.0
  %671 = vmatprep.subr.mxu0 0.0
  %672 = vmatpush2.msra.mxu0 0.0
  %673 = vmatprep.subr.mxu0 0.0
  %674 = vmatpush2.msra.mxu0 0.0
  %675 = vmatprep.subr.mxu0 0.0
  %676 = vmatpush2.msra.mxu0 0.0
  %677 = vmatprep.subr.mxu0 0.0
  %678 = vmatpush2.msra.mxu0 0.0
  %679 = vmatprep.subr.mxu0 0.0
  %680 = vmatpush2.msra.mxu0 0.0
  %681 = vmatprep.subr.mxu0 0.0
  %682 = vmatpush2.msra.mxu0 0.0
  %683 = vmatprep.subr.mxu0 0.0
  %684 = vmatpush2.msra.mxu0 0.0
  %685 = vmatprep.subr.mxu0 0.0
  %686 = vmatpush2.msra.mxu0 0.0
  %687 = vmatprep.subr.mxu0 0.0
  %688 = vmatpush2.msra.mxu0 0.0
  %689 = vmatprep.subr.mxu0 0.0
  %690 = vmatpush2.msra.mxu0 0.0
  %691 = vmatprep.mubr.f32.mxu0 0.0
  %692 = vmatmul.mubr.f32.gmra.mxu0 %v244
  %v693 = vpop.f32.mrf.mxu0
  %v694 = vadd.f32 0.0, %v693
  %v695 = vpop.f32.mrf.mxu0
  %v696 = vadd.f32 0.0, %v695
  %697 = vdwg.mxu0
  %698 = vmatprep.subr.mxu0 0.0
  %699 = vmatpush1.msra.mxu0 0.0
  %700 = vmatprep.subr.mxu0 0.0
  %701 = vmatpush1.msra.mxu0 0.0
  %702 = vmatprep.subr.mxu0 0.0
  %703 = vmatpush1.msra.mxu0 0.0
  %704 = vmatprep.subr.mxu0 0.0
  %705 = vmatpush1.msra.mxu0 0.0
  %706 = vmatprep.subr.mxu0 0.0
  %707 = vmatpush1.msra.mxu0 0.0
  %708 = vmatprep.subr.mxu0 0.0
  %709 = vmatpush1.msra.mxu0 0.0
  %710 = vmatprep.subr.mxu0 0.0
  %711 = vmatpush1.msra.mxu0 0.0
  %712 = vmatprep.subr.mxu0 0.0
  %713 = vmatpush1.msra.mxu0 0.0
  %714 = vmatprep.subr.mxu0 0.0
  %715 = vmatpush1.msra.mxu0 0.0
  %716 = vmatprep.subr.mxu0 %v281
  %717 = vmatpush1.msra.mxu0 %v278
  %718 = vmatprep.subr.mxu0 %v189
  %719 = vmatpush1.msra.mxu0 %v188
  %720 = vmatprep.subr.mxu0 %v157
  %721 = vmatpush1.msra.mxu0 %v156
  %722 = vmatprep.subr.mxu0 %v125
  %723 = vmatpush1.msra.mxu0 %v124
  %724 = vmatprep.subr.mxu0 %v93
  %725 = vmatpush1.msra.mxu0 %v92
  %726 = vmatprep.subr.mxu0 %v61
  %727 = vmatpush1.msra.mxu0 %v60
  %728 = vmatprep.subr.mxu0 %v29
  %729 = vmatpush1.msra.mxu0 %v28
  %730 = vmatprep.subr.mxu0 0.0
  %731 = vmatpush2.msra.mxu0 0.0
  %732 = vmatprep.subr.mxu0 0.0
  %733 = vmatpush2.msra.mxu0 0.0
  %734 = vmatprep.subr.mxu0 0.0
  %735 = vmatpush2.msra.mxu0 0.0
  %736 = vmatprep.subr.mxu0 0.0
  %737 = vmatpush2.msra.mxu0 0.0
  %738 = vmatprep.subr.mxu0 0.0
  %739 = vmatpush2.msra.mxu0 0.0
  %740 = vmatprep.subr.mxu0 0.0
  %741 = vmatpush2.msra.mxu0 0.0
  %742 = vmatprep.subr.mxu0 0.0
  %743 = vmatpush2.msra.mxu0 0.0
  %744 = vmatprep.subr.mxu0 0.0
  %745 = vmatpush2.msra.mxu0 0.0
  %746 = vmatprep.subr.mxu0 0.0
  %747 = vmatpush2.msra.mxu0 0.0
  %748 = vmatprep.subr.mxu0 0.0
  %749 = vmatpush2.msra.mxu0 0.0
  %750 = vmatprep.subr.mxu0 0.0
  %751 = vmatpush2.msra.mxu0 0.0
  %752 = vmatprep.subr.mxu0 0.0
  %753 = vmatpush2.msra.mxu0 0.0
  %754 = vmatprep.subr.mxu0 0.0
  %755 = vmatpush2.msra.mxu0 0.0
  %756 = vmatprep.subr.mxu0 0.0
  %757 = vmatpush2.msra.mxu0 0.0
  %758 = vmatprep.subr.mxu0 0.0
  %759 = vmatpush2.msra.mxu0 0.0
  %760 = vmatprep.subr.mxu0 0.0
  %761 = vmatpush2.msra.mxu0 0.0
  %762 = vmatprep.mubr.f32.mxu0 0.0
  %763 = vmatmul.mubr.f32.gmra.mxu0 %v244
  %v764 = vpop.f32.mrf.mxu0
  %v765 = vadd.f32 0.0, %v764
  %v766 = vpop.f32.mrf.mxu0
  %v767 = vadd.f32 0.0, %v766
  %768 = vdwg.mxu0
  %769 = vmatprep.subr.mxu0 0.0
  %770 = vmatpush1.msra.mxu0 0.0
  %771 = vmatprep.subr.mxu0 0.0
  %772 = vmatpush1.msra.mxu0 0.0
  %773 = vmatprep.subr.mxu0 0.0
  %774 = vmatpush1.msra.mxu0 0.0
  %775 = vmatprep.subr.mxu0 0.0
  %776 = vmatpush1.msra.mxu0 0.0
  %777 = vmatprep.subr.mxu0 0.0
  %778 = vmatpush1.msra.mxu0 0.0
  %779 = vmatprep.subr.mxu0 0.0
  %780 = vmatpush1.msra.mxu0 0.0
  %781 = vmatprep.subr.mxu0 0.0
  %782 = vmatpush1.msra.mxu0 0.0
  %783 = vmatprep.subr.mxu0 0.0
  %784 = vmatpush1.msra.mxu0 0.0
  %785 = vmatprep.subr.mxu0 0.0
  %786 = vmatpush1.msra.mxu0 0.0
  %787 = vmatprep.subr.mxu0 %v287
  %788 = vmatpush1.msra.mxu0 %v284
  %789 = vmatprep.subr.mxu0 %v191
  %790 = vmatpush1.msra.mxu0 %v190
  %791 = vmatprep.subr.mxu0 %v159
  %792 = vmatpush1.msra.mxu0 %v158
  %793 = vmatprep.subr.mxu0 %v127
  %794 = vmatpush1.msra.mxu0 %v126
  %795 = vmatprep.subr.mxu0 %v95
  %796 = vmatpush1.msra.mxu0 %v94
  %797 = vmatprep.subr.mxu0 %v63
  %798 = vmatpush1.msra.mxu0 %v62
  %799 = vmatprep.subr.mxu0 %v31
  %800 = vmatpush1.msra.mxu0 %v30
  %801 = vmatprep.subr.mxu0 0.0
  %802 = vmatpush2.msra.mxu0 0.0
  %803 = vmatprep.subr.mxu0 0.0
  %804 = vmatpush2.msra.mxu0 0.0
  %805 = vmatprep.subr.mxu0 0.0
  %806 = vmatpush2.msra.mxu0 0.0
  %807 = vmatprep.subr.mxu0 0.0
  %808 = vmatpush2.msra.mxu0 0.0
  %809 = vmatprep.subr.mxu0 0.0
  %810 = vmatpush2.msra.mxu0 0.0
  %811 = vmatprep.subr.mxu0 0.0
  %812 = vmatpush2.msra.mxu0 0.0
  %813 = vmatprep.subr.mxu0 0.0
  %814 = vmatpush2.msra.mxu0 0.0
  %815 = vmatprep.subr.mxu0 0.0
  %816 = vmatpush2.msra.mxu0 0.0
  %817 = vmatprep.subr.mxu0 0.0
  %818 = vmatpush2.msra.mxu0 0.0
  %819 = vmatprep.subr.mxu0 0.0
  %820 = vmatpush2.msra.mxu0 0.0
  %821 = vmatprep.subr.mxu0 0.0
  %822 = vmatpush2.msra.mxu0 0.0
  %823 = vmatprep.subr.mxu0 0.0
  %824 = vmatpush2.msra.mxu0 0.0
  %825 = vmatprep.subr.mxu0 0.0
  %826 = vmatpush2.msra.mxu0 0.0
  %827 = vmatprep.subr.mxu0 0.0
  %828 = vmatpush2.msra.mxu0 0.0
  %829 = vmatprep.subr.mxu0 0.0
  %830 = vmatpush2.msra.mxu0 0.0
  %831 = vmatprep.subr.mxu0 0.0
  %832 = vmatpush2.msra.mxu0 0.0
  %833 = vmatprep.mubr.f32.mxu0 0.0
  %834 = vmatmul.mubr.f32.gmra.mxu0 %v244
  %v835 = vpop.f32.mrf.mxu0
  %v836 = vadd.f32 0.0, %v835
  %v837 = vpop.f32.mrf.mxu0
  %v838 = vadd.f32 0.0, %v837
  %839 = vdwg.mxu0
  %840 = vmatprep.subr.mxu0 0.0
  %841 = vmatpush1.msra.mxu0 0.0
  %842 = vmatprep.subr.mxu0 0.0
  %843 = vmatpush1.msra.mxu0 0.0
  %844 = vmatprep.subr.mxu0 0.0
  %845 = vmatpush1.msra.mxu0 0.0
  %846 = vmatprep.subr.mxu0 0.0
  %847 = vmatpush1.msra.mxu0 0.0
  %848 = vmatprep.subr.mxu0 0.0
  %849 = vmatpush1.msra.mxu0 0.0
  %850 = vmatprep.subr.mxu0 0.0
  %851 = vmatpush1.msra.mxu0 0.0
  %852 = vmatprep.subr.mxu0 0.0
  %853 = vmatpush1.msra.mxu0 0.0
  %854 = vmatprep.subr.mxu0 0.0
  %855 = vmatpush1.msra.mxu0 0.0
  %856 = vmatprep.subr.mxu0 0.0
  %857 = vmatpush1.msra.mxu0 0.0
  %858 = vmatprep.subr.mxu0 %v293
  %859 = vmatpush1.msra.mxu0 %v290
  %860 = vmatprep.subr.mxu0 %v193
  %861 = vmatpush1.msra.mxu0 %v192
  %862 = vmatprep.subr.mxu0 %v161
  %863 = vmatpush1.msra.mxu0 %v160
  %864 = vmatprep.subr.mxu0 %v129
  %865 = vmatpush1.msra.mxu0 %v128
  %866 = vmatprep.subr.mxu0 %v97
  %867 = vmatpush1.msra.mxu0 %v96
  %868 = vmatprep.subr.mxu0 %v65
  %869 = vmatpush1.msra.mxu0 %v64
  %870 = vmatprep.subr.mxu0 %v33
  %871 = vmatpush1.msra.mxu0 %v32
  %872 = vmatprep.subr.mxu0 0.0
  %873 = vmatpush2.msra.mxu0 0.0
  %874 = vmatprep.subr.mxu0 0.0
  %875 = vmatpush2.msra.mxu0 0.0
  %876 = vmatprep.subr.mxu0 0.0
  %877 = vmatpush2.msra.mxu0 0.0
  %878 = vmatprep.subr.mxu0 0.0
  %879 = vmatpush2.msra.mxu0 0.0
  %880 = vmatprep.subr.mxu0 0.0
  %881 = vmatpush2.msra.mxu0 0.0
  %882 = vmatprep.subr.mxu0 0.0
  %883 = vmatpush2.msra.mxu0 0.0
  %884 = vmatprep.subr.mxu0 0.0
  %885 = vmatpush2.msra.mxu0 0.0
  %886 = vmatprep.subr.mxu0 0.0
  %887 = vmatpush2.msra.mxu0 0.0
  %888 = vmatprep.subr.mxu0 0.0
  %889 = vmatpush2.msra.mxu0 0.0
  %890 = vmatprep.subr.mxu0 0.0
  %891 = vmatpush2.msra.mxu0 0.0
  %892 = vmatprep.subr.mxu0 0.0
  %893 = vmatpush2.msra.mxu0 0.0
  %894 = vmatprep.subr.mxu0 0.0
  %895 = vmatpush2.msra.mxu0 0.0
  %896 = vmatprep.subr.mxu0 0.0
  %897 = vmatpush2.msra.mxu0 0.0
  %898 = vmatprep.subr.mxu0 0.0
  %899 = vmatpush2.msra.mxu0 0.0
  %900 = vmatprep.subr.mxu0 0.0
  %901 = vmatpush2.msra.mxu0 0.0
  %902 = vmatprep.subr.mxu0 0.0
  %903 = vmatpush2.msra.mxu0 0.0
  %904 = vmatprep.mubr.f32.mxu0 0.0
  %905 = vmatmul.mubr.f32.gmra.mxu0 %v244
  %v906 = vpop.f32.mrf.mxu0
  %v907 = vadd.f32 0.0, %v906
  %v908 = vpop.f32.mrf.mxu0
  %v909 = vadd.f32 0.0, %v908
  %910 = vdwg.mxu0
  %911 = vmatprep.subr.mxu0 0.0
  %912 = vmatpush1.msra.mxu0 0.0
  %913 = vmatprep.subr.mxu0 0.0
  %914 = vmatpush1.msra.mxu0 0.0
  %915 = vmatprep.subr.mxu0 0.0
  %916 = vmatpush1.msra.mxu0 0.0
  %917 = vmatprep.subr.mxu0 0.0
  %918 = vmatpush1.msra.mxu0 0.0
  %919 = vmatprep.subr.mxu0 0.0
  %920 = vmatpush1.msra.mxu0 0.0
  %921 = vmatprep.subr.mxu0 0.0
  %922 = vmatpush1.msra.mxu0 0.0
  %923 = vmatprep.subr.mxu0 0.0
  %924 = vmatpush1.msra.mxu0 0.0
  %925 = vmatprep.subr.mxu0 0.0
  %926 = vmatpush1.msra.mxu0 0.0
  %927 = vmatprep.subr.mxu0 0.0
  %928 = vmatpush1.msra.mxu0 0.0
  %929 = vmatprep.subr.mxu0 %v299
  %930 = vmatpush1.msra.mxu0 %v296
  %931 = vmatprep.subr.mxu0 %v195
  %932 = vmatpush1.msra.mxu0 %v194
  %933 = vmatprep.subr.mxu0 %v163
  %934 = vmatpush1.msra.mxu0 %v162
  %935 = vmatprep.subr.mxu0 %v131
  %936 = vmatpush1.msra.mxu0 %v130
  %937 = vmatprep.subr.mxu0 %v99
  %938 = vmatpush1.msra.mxu0 %v98
  %939 = vmatprep.subr.mxu0 %v67
  %940 = vmatpush1.msra.mxu0 %v66
  %941 = vmatprep.subr.mxu0 %v35
  %942 = vmatpush1.msra.mxu0 %v34
  %943 = vmatprep.subr.mxu0 0.0
  %944 = vmatpush2.msra.mxu0 0.0
  %945 = vmatprep.subr.mxu0 0.0
  %946 = vmatpush2.msra.mxu0 0.0
  %947 = vmatprep.subr.mxu0 0.0
  %948 = vmatpush2.msra.mxu0 0.0
  %949 = vmatprep.subr.mxu0 0.0
  %950 = vmatpush2.msra.mxu0 0.0
  %951 = vmatprep.subr.mxu0 0.0
  %952 = vmatpush2.msra.mxu0 0.0
  %953 = vmatprep.subr.mxu0 0.0
  %954 = vmatpush2.msra.mxu0 0.0
  %955 = vmatprep.subr.mxu0 0.0
  %956 = vmatpush2.msra.mxu0 0.0
  %957 = vmatprep.subr.mxu0 0.0
  %958 = vmatpush2.msra.mxu0 0.0
  %959 = vmatprep.subr.mxu0 0.0
  %960 = vmatpush2.msra.mxu0 0.0
  %961 = vmatprep.subr.mxu0 0.0
  %962 = vmatpush2.msra.mxu0 0.0
  %963 = vmatprep.subr.mxu0 0.0
  %964 = vmatpush2.msra.mxu0 0.0
  %965 = vmatprep.subr.mxu0 0.0
  %966 = vmatpush2.msra.mxu0 0.0
  %967 = vmatprep.subr.mxu0 0.0
  %968 = vmatpush2.msra.mxu0 0.0
  %969 = vmatprep.subr.mxu0 0.0
  %970 = vmatpush2.msra.mxu0 0.0
  %971 = vmatprep.subr.mxu0 0.0
  %972 = vmatpush2.msra.mxu0 0.0
  %973 = vmatprep.subr.mxu0 0.0
  %974 = vmatpush2.msra.mxu0 0.0
  %975 = vmatprep.mubr.f32.mxu0 0.0
  %976 = vmatmul.mubr.f32.gmra.mxu0 %v244
  %v977 = vpop.f32.mrf.mxu0
  %v978 = vadd.f32 0.0, %v977
  %v979 = vpop.f32.mrf.mxu0
  %v980 = vadd.f32 0.0, %v979
  %981 = vdwg.mxu0
  %982 = vmatprep.subr.mxu0 0.0
  %983 = vmatpush1.msra.mxu0 0.0
  %984 = vmatprep.subr.mxu0 0.0
  %985 = vmatpush1.msra.mxu0 0.0
  %986 = vmatprep.subr.mxu0 0.0
  %987 = vmatpush1.msra.mxu0 0.0
  %988 = vmatprep.subr.mxu0 0.0
  %989 = vmatpush1.msra.mxu0 0.0
  %990 = vmatprep.subr.mxu0 0.0
  %991 = vmatpush1.msra.mxu0 0.0
  %992 = vmatprep.subr.mxu0 0.0
  %993 = vmatpush1.msra.mxu0 0.0
  %994 = vmatprep.subr.mxu0 0.0
  %995 = vmatpush1.msra.mxu0 0.0
  %996 = vmatprep.subr.mxu0 0.0
  %997 = vmatpush1.msra.mxu0 0.0
  %998 = vmatprep.subr.mxu0 0.0
  %999 = vmatpush1.msra.mxu0 0.0
  %1000 = vmatprep.subr.mxu0 %v305
  %1001 = vmatpush1.msra.mxu0 %v302
  %1002 = vmatprep.subr.mxu0 %v197
  %1003 = vmatpush1.msra.mxu0 %v196
  %1004 = vmatprep.subr.mxu0 %v165
  %1005 = vmatpush1.msra.mxu0 %v164
  %1006 = vmatprep.subr.mxu0 %v133
  %1007 = vmatpush1.msra.mxu0 %v132
  %1008 = vmatprep.subr.mxu0 %v101
  %1009 = vmatpush1.msra.mxu0 %v100
  %1010 = vmatprep.subr.mxu0 %v69
  %1011 = vmatpush1.msra.mxu0 %v68
  %1012 = vmatprep.subr.mxu0 %v37
  %1013 = vmatpush1.msra.mxu0 %v36
  %1014 = vmatprep.subr.mxu0 0.0
  %1015 = vmatpush2.msra.mxu0 0.0
  %1016 = vmatprep.subr.mxu0 0.0
  %1017 = vmatpush2.msra.mxu0 0.0
  %1018 = vmatprep.subr.mxu0 0.0
  %1019 = vmatpush2.msra.mxu0 0.0
  %1020 = vmatprep.subr.mxu0 0.0
  %1021 = vmatpush2.msra.mxu0 0.0
  %1022 = vmatprep.subr.mxu0 0.0
  %1023 = vmatpush2.msra.mxu0 0.0
  %1024 = vmatprep.subr.mxu0 0.0
  %1025 = vmatpush2.msra.mxu0 0.0
  %1026 = vmatprep.subr.mxu0 0.0
  %1027 = vmatpush2.msra.mxu0 0.0
  %1028 = vmatprep.subr.mxu0 0.0
  %1029 = vmatpush2.msra.mxu0 0.0
  %1030 = vmatprep.subr.mxu0 0.0
  %1031 = vmatpush2.msra.mxu0 0.0
  %1032 = vmatprep.subr.mxu0 0.0
  %1033 = vmatpush2.msra.mxu0 0.0
  %1034 = vmatprep.subr.mxu0 0.0
  %1035 = vmatpush2.msra.mxu0 0.0
  %1036 = vmatprep.subr.mxu0 0.0
  %1037 = vmatpush2.msra.mxu0 0.0
  %1038 = vmatprep.subr.mxu0 0.0
  %1039 = vmatpush2.msra.mxu0 0.0
  %1040 = vmatprep.subr.mxu0 0.0
  %1041 = vmatpush2.msra.mxu0 0.0
  %1042 = vmatprep.subr.mxu0 0.0
  %1043 = vmatpush2.msra.mxu0 0.0
  %1044 = vmatprep.subr.mxu0 0.0
  %1045 = vmatpush2.msra.mxu0 0.0
  %1046 = vmatprep.mubr.f32.mxu0 0.0
  %1047 = vmatmul.mubr.f32.gmra.mxu0 %v244
  %v1048 = vpop.f32.mrf.mxu0
  %v1049 = vadd.f32 0.0, %v1048
  %v1050 = vpop.f32.mrf.mxu0
  %v1051 = vadd.f32 0.0, %v1050
  %1052 = vdwg.mxu0
  %1053 = vmatprep.subr.mxu0 0.0
  %1054 = vmatpush1.msra.mxu0 0.0
  %1055 = vmatprep.subr.mxu0 0.0
  %1056 = vmatpush1.msra.mxu0 0.0
  %1057 = vmatprep.subr.mxu0 0.0
  %1058 = vmatpush1.msra.mxu0 0.0
  %1059 = vmatprep.subr.mxu0 0.0
  %1060 = vmatpush1.msra.mxu0 0.0
  %1061 = vmatprep.subr.mxu0 0.0
  %1062 = vmatpush1.msra.mxu0 0.0
  %1063 = vmatprep.subr.mxu0 0.0
  %1064 = vmatpush1.msra.mxu0 0.0
  %1065 = vmatprep.subr.mxu0 0.0
  %1066 = vmatpush1.msra.mxu0 0.0
  %1067 = vmatprep.subr.mxu0 0.0
  %1068 = vmatpush1.msra.mxu0 0.0
  %1069 = vmatprep.subr.mxu0 0.0
  %1070 = vmatpush1.msra.mxu0 0.0
  %1071 = vmatprep.subr.mxu0 %v311
  %1072 = vmatpush1.msra.mxu0 %v308
  %1073 = vmatprep.subr.mxu0 %v199
  %1074 = vmatpush1.msra.mxu0 %v198
  %1075 = vmatprep.subr.mxu0 %v167
  %1076 = vmatpush1.msra.mxu0 %v166
  %1077 = vmatprep.subr.mxu0 %v135
  %1078 = vmatpush1.msra.mxu0 %v134
  %1079 = vmatprep.subr.mxu0 %v103
  %1080 = vmatpush1.msra.mxu0 %v102
  %1081 = vmatprep.subr.mxu0 %v71
  %1082 = vmatpush1.msra.mxu0 %v70
  %1083 = vmatprep.subr.mxu0 %v39
  %1084 = vmatpush1.msra.mxu0 %v38
  %1085 = vmatprep.subr.mxu0 0.0
  %1086 = vmatpush2.msra.mxu0 0.0
  %1087 = vmatprep.subr.mxu0 0.0
  %1088 = vmatpush2.msra.mxu0 0.0
  %1089 = vmatprep.subr.mxu0 0.0
  %1090 = vmatpush2.msra.mxu0 0.0
  %1091 = vmatprep.subr.mxu0 0.0
  %1092 = vmatpush2.msra.mxu0 0.0
  %1093 = vmatprep.subr.mxu0 0.0
  %1094 = vmatpush2.msra.mxu0 0.0
  %1095 = vmatprep.subr.mxu0 0.0
  %1096 = vmatpush2.msra.mxu0 0.0
  %1097 = vmatprep.subr.mxu0 0.0
  %1098 = vmatpush2.msra.mxu0 0.0
  %1099 = vmatprep.subr.mxu0 0.0
  %1100 = vmatpush2.msra.mxu0 0.0
  %1101 = vmatprep.subr.mxu0 0.0
  %1102 = vmatpush2.msra.mxu0 0.0
  %1103 = vmatprep.subr.mxu0 0.0
  %1104 = vmatpush2.msra.mxu0 0.0
  %1105 = vmatprep.subr.mxu0 0.0
  %1106 = vmatpush2.msra.mxu0 0.0
  %1107 = vmatprep.subr.mxu0 0.0
  %1108 = vmatpush2.msra.mxu0 0.0
  %1109 = vmatprep.subr.mxu0 0.0
  %1110 = vmatpush2.msra.mxu0 0.0
  %1111 = vmatprep.subr.mxu0 0.0
  %1112 = vmatpush2.msra.mxu0 0.0
  %1113 = vmatprep.subr.mxu0 0.0
  %1114 = vmatpush2.msra.mxu0 0.0
  %1115 = vmatprep.subr.mxu0 0.0
  %1116 = vmatpush2.msra.mxu0 0.0
  %1117 = vmatprep.mubr.f32.mxu0 0.0
  %1118 = vmatmul.mubr.f32.gmra.mxu0 %v244
  %v1119 = vpop.f32.mrf.mxu0
  %v1120 = vadd.f32 0.0, %v1119
  %v1121 = vpop.f32.mrf.mxu0
  %v1122 = vadd.f32 0.0, %v1121
  %1123 = vdwg.mxu0
  %1124 = vmatprep.subr.mxu0 0.0
  %1125 = vmatpush1.msra.mxu0 0.0
  %1126 = vmatprep.subr.mxu0 0.0
  %1127 = vmatpush1.msra.mxu0 0.0
  %1128 = vmatprep.subr.mxu0 0.0
  %1129 = vmatpush1.msra.mxu0 0.0
  %1130 = vmatprep.subr.mxu0 0.0
  %1131 = vmatpush1.msra.mxu0 0.0
  %1132 = vmatprep.subr.mxu0 0.0
  %1133 = vmatpush1.msra.mxu0 0.0
  %1134 = vmatprep.subr.mxu0 0.0
  %1135 = vmatpush1.msra.mxu0 0.0
  %1136 = vmatprep.subr.mxu0 0.0
  %1137 = vmatpush1.msra.mxu0 0.0
  %1138 = vmatprep.subr.mxu0 0.0
  %1139 = vmatpush1.msra.mxu0 0.0
  %1140 = vmatprep.subr.mxu0 0.0
  %1141 = vmatpush1.msra.mxu0 0.0
  %1142 = vmatprep.subr.mxu0 %v317
  %1143 = vmatpush1.msra.mxu0 %v314
  %1144 = vmatprep.subr.mxu0 %v201
  %1145 = vmatpush1.msra.mxu0 %v200
  %1146 = vmatprep.subr.mxu0 %v169
  %1147 = vmatpush1.msra.mxu0 %v168
  %1148 = vmatprep.subr.mxu0 %v137
  %1149 = vmatpush1.msra.mxu0 %v136
  %1150 = vmatprep.subr.mxu0 %v105
  %1151 = vmatpush1.msra.mxu0 %v104
  %1152 = vmatprep.subr.mxu0 %v73
  %1153 = vmatpush1.msra.mxu0 %v72
  %1154 = vmatprep.subr.mxu0 %v41
  %1155 = vmatpush1.msra.mxu0 %v40
  %1156 = vmatprep.subr.mxu0 0.0
  %1157 = vmatpush2.msra.mxu0 0.0
  %1158 = vmatprep.subr.mxu0 0.0
  %1159 = vmatpush2.msra.mxu0 0.0
  %1160 = vmatprep.subr.mxu0 0.0
  %1161 = vmatpush2.msra.mxu0 0.0
  %1162 = vmatprep.subr.mxu0 0.0
  %1163 = vmatpush2.msra.mxu0 0.0
  %1164 = vmatprep.subr.mxu0 0.0
  %1165 = vmatpush2.msra.mxu0 0.0
  %1166 = vmatprep.subr.mxu0 0.0
  %1167 = vmatpush2.msra.mxu0 0.0
  %1168 = vmatprep.subr.mxu0 0.0
  %1169 = vmatpush2.msra.mxu0 0.0
  %1170 = vmatprep.subr.mxu0 0.0
  %1171 = vmatpush2.msra.mxu0 0.0
  %1172 = vmatprep.subr.mxu0 0.0
  %1173 = vmatpush2.msra.mxu0 0.0
  %1174 = vmatprep.subr.mxu0 0.0
  %1175 = vmatpush2.msra.mxu0 0.0
  %1176 = vmatprep.subr.mxu0 0.0
  %1177 = vmatpush2.msra.mxu0 0.0
  %1178 = vmatprep.subr.mxu0 0.0
  %1179 = vmatpush2.msra.mxu0 0.0
  %1180 = vmatprep.subr.mxu0 0.0
  %1181 = vmatpush2.msra.mxu0 0.0
  %1182 = vmatprep.subr.mxu0 0.0
  %1183 = vmatpush2.msra.mxu0 0.0
  %1184 = vmatprep.subr.mxu0 0.0
  %1185 = vmatpush2.msra.mxu0 0.0
  %1186 = vmatprep.subr.mxu0 0.0
  %1187 = vmatpush2.msra.mxu0 0.0
  %1188 = vmatprep.mubr.f32.mxu0 0.0
  %1189 = vmatmul.mubr.f32.gmra.mxu0 %v244
  %v1190 = vpop.f32.mrf.mxu0
  %v1191 = vadd.f32 0.0, %v1190
  %v1192 = vpop.f32.mrf.mxu0
  %v1193 = vadd.f32 0.0, %v1192
  %1194 = vdwg.mxu0
  %1195 = vmatprep.subr.mxu0 0.0
  %1196 = vmatpush1.msra.mxu0 0.0
  %1197 = vmatprep.subr.mxu0 0.0
  %1198 = vmatpush1.msra.mxu0 0.0
  %1199 = vmatprep.subr.mxu0 0.0
  %1200 = vmatpush1.msra.mxu0 0.0
  %1201 = vmatprep.subr.mxu0 0.0
  %1202 = vmatpush1.msra.mxu0 0.0
  %1203 = vmatprep.subr.mxu0 0.0
  %1204 = vmatpush1.msra.mxu0 0.0
  %1205 = vmatprep.subr.mxu0 0.0
  %1206 = vmatpush1.msra.mxu0 0.0
  %1207 = vmatprep.subr.mxu0 0.0
  %1208 = vmatpush1.msra.mxu0 0.0
  %1209 = vmatprep.subr.mxu0 0.0
  %1210 = vmatpush1.msra.mxu0 0.0
  %1211 = vmatprep.subr.mxu0 0.0
  %1212 = vmatpush1.msra.mxu0 0.0
  %1213 = vmatprep.subr.mxu0 %v323
  %1214 = vmatpush1.msra.mxu0 %v320
  %1215 = vmatprep.subr.mxu0 %v203
  %1216 = vmatpush1.msra.mxu0 %v202
  %1217 = vmatprep.subr.mxu0 %v171
  %1218 = vmatpush1.msra.mxu0 %v170
  %1219 = vmatprep.subr.mxu0 %v139
  %1220 = vmatpush1.msra.mxu0 %v138
  %1221 = vmatprep.subr.mxu0 %v107
  %1222 = vmatpush1.msra.mxu0 %v106
  %1223 = vmatprep.subr.mxu0 %v75
  %1224 = vmatpush1.msra.mxu0 %v74
  %1225 = vmatprep.subr.mxu0 %v43
  %1226 = vmatpush1.msra.mxu0 %v42
  %1227 = vmatprep.subr.mxu0 0.0
  %1228 = vmatpush2.msra.mxu0 0.0
  %1229 = vmatprep.subr.mxu0 0.0
  %1230 = vmatpush2.msra.mxu0 0.0
  %1231 = vmatprep.subr.mxu0 0.0
  %1232 = vmatpush2.msra.mxu0 0.0
  %1233 = vmatprep.subr.mxu0 0.0
  %1234 = vmatpush2.msra.mxu0 0.0
  %1235 = vmatprep.subr.mxu0 0.0
  %1236 = vmatpush2.msra.mxu0 0.0
  %1237 = vmatprep.subr.mxu0 0.0
  %1238 = vmatpush2.msra.mxu0 0.0
  %1239 = vmatprep.subr.mxu0 0.0
  %1240 = vmatpush2.msra.mxu0 0.0
  %1241 = vmatprep.subr.mxu0 0.0
  %1242 = vmatpush2.msra.mxu0 0.0
  %1243 = vmatprep.subr.mxu0 0.0
  %1244 = vmatpush2.msra.mxu0 0.0
  %1245 = vmatprep.subr.mxu0 0.0
  %1246 = vmatpush2.msra.mxu0 0.0
  %1247 = vmatprep.subr.mxu0 0.0
  %1248 = vmatpush2.msra.mxu0 0.0
  %1249 = vmatprep.subr.mxu0 0.0
  %1250 = vmatpush2.msra.mxu0 0.0
  %1251 = vmatprep.subr.mxu0 0.0
  %1252 = vmatpush2.msra.mxu0 0.0
  %1253 = vmatprep.subr.mxu0 0.0
  %1254 = vmatpush2.msra.mxu0 0.0
  %1255 = vmatprep.subr.mxu0 0.0
  %1256 = vmatpush2.msra.mxu0 0.0
  %1257 = vmatprep.subr.mxu0 0.0
  %1258 = vmatpush2.msra.mxu0 0.0
  %1259 = vmatprep.mubr.f32.mxu0 0.0
  %1260 = vmatmul.mubr.f32.gmra.mxu0 %v244
  %v1261 = vpop.f32.mrf.mxu0
  %v1262 = vadd.f32 0.0, %v1261
  %v1263 = vpop.f32.mrf.mxu0
  %v1264 = vadd.f32 0.0, %v1263
  %1265 = vdwg.mxu0
  %1266 = vmatprep.subr.mxu0 0.0
  %1267 = vmatpush1.msra.mxu0 0.0
  %1268 = vmatprep.subr.mxu0 0.0
  %1269 = vmatpush1.msra.mxu0 0.0
  %1270 = vmatprep.subr.mxu0 0.0
  %1271 = vmatpush1.msra.mxu0 0.0
  %1272 = vmatprep.subr.mxu0 0.0
  %1273 = vmatpush1.msra.mxu0 0.0
  %1274 = vmatprep.subr.mxu0 0.0
  %1275 = vmatpush1.msra.mxu0 0.0
  %1276 = vmatprep.subr.mxu0 0.0
  %1277 = vmatpush1.msra.mxu0 0.0
  %1278 = vmatprep.subr.mxu0 0.0
  %1279 = vmatpush1.msra.mxu0 0.0
  %1280 = vmatprep.subr.mxu0 0.0
  %1281 = vmatpush1.msra.mxu0 0.0
  %1282 = vmatprep.subr.mxu0 0.0
  %1283 = vmatpush1.msra.mxu0 0.0
  %1284 = vmatprep.subr.mxu0 %v329
  %1285 = vmatpush1.msra.mxu0 %v326
  %1286 = vmatprep.subr.mxu0 %v205
  %1287 = vmatpush1.msra.mxu0 %v204
  %1288 = vmatprep.subr.mxu0 %v173
  %1289 = vmatpush1.msra.mxu0 %v172
  %1290 = vmatprep.subr.mxu0 %v141
  %1291 = vmatpush1.msra.mxu0 %v140
  %1292 = vmatprep.subr.mxu0 %v109
  %1293 = vmatpush1.msra.mxu0 %v108
  %1294 = vmatprep.subr.mxu0 %v77
  %1295 = vmatpush1.msra.mxu0 %v76
  %1296 = vmatprep.subr.mxu0 %v45
  %1297 = vmatpush1.msra.mxu0 %v44
  %1298 = vmatprep.subr.mxu0 0.0
  %1299 = vmatpush2.msra.mxu0 0.0
  %1300 = vmatprep.subr.mxu0 0.0
  %1301 = vmatpush2.msra.mxu0 0.0
  %1302 = vmatprep.subr.mxu0 0.0
  %1303 = vmatpush2.msra.mxu0 0.0
  %1304 = vmatprep.subr.mxu0 0.0
  %1305 = vmatpush2.msra.mxu0 0.0
  %1306 = vmatprep.subr.mxu0 0.0
  %1307 = vmatpush2.msra.mxu0 0.0
  %1308 = vmatprep.subr.mxu0 0.0
  %1309 = vmatpush2.msra.mxu0 0.0
  %1310 = vmatprep.subr.mxu0 0.0
  %1311 = vmatpush2.msra.mxu0 0.0
  %1312 = vmatprep.subr.mxu0 0.0
  %1313 = vmatpush2.msra.mxu0 0.0
  %1314 = vmatprep.subr.mxu0 0.0
  %1315 = vmatpush2.msra.mxu0 0.0
  %1316 = vmatprep.subr.mxu0 0.0
  %1317 = vmatpush2.msra.mxu0 0.0
  %1318 = vmatprep.subr.mxu0 0.0
  %1319 = vmatpush2.msra.mxu0 0.0
  %1320 = vmatprep.subr.mxu0 0.0
  %1321 = vmatpush2.msra.mxu0 0.0
  %1322 = vmatprep.subr.mxu0 0.0
  %1323 = vmatpush2.msra.mxu0 0.0
  %1324 = vmatprep.subr.mxu0 0.0
  %1325 = vmatpush2.msra.mxu0 0.0
  %1326 = vmatprep.subr.mxu0 0.0
  %1327 = vmatpush2.msra.mxu0 0.0
  %1328 = vmatprep.subr.mxu0 0.0
  %1329 = vmatpush2.msra.mxu0 0.0
  %1330 = vmatprep.mubr.f32.mxu0 0.0
  %1331 = vmatmul.mubr.f32.gmra.mxu0 %v244
  %v1332 = vpop.f32.mrf.mxu0
  %v1333 = vadd.f32 0.0, %v1332
  %v1334 = vpop.f32.mrf.mxu0
  %v1335 = vadd.f32 0.0, %v1334
  %1336 = vdwg.mxu0
  %1337 = vmatprep.subr.mxu0 0.0
  %1338 = vmatpush1.msra.mxu0 0.0
  %1339 = vmatprep.subr.mxu0 0.0
  %1340 = vmatpush1.msra.mxu0 0.0
  %1341 = vmatprep.subr.mxu0 0.0
  %1342 = vmatpush1.msra.mxu0 0.0
  %1343 = vmatprep.subr.mxu0 0.0
  %1344 = vmatpush1.msra.mxu0 0.0
  %1345 = vmatprep.subr.mxu0 0.0
  %1346 = vmatpush1.msra.mxu0 0.0
  %1347 = vmatprep.subr.mxu0 0.0
  %1348 = vmatpush1.msra.mxu0 0.0
  %1349 = vmatprep.subr.mxu0 0.0
  %1350 = vmatpush1.msra.mxu0 0.0
  %1351 = vmatprep.subr.mxu0 0.0
  %1352 = vmatpush1.msra.mxu0 0.0
  %1353 = vmatprep.subr.mxu0 0.0
  %1354 = vmatpush1.msra.mxu0 0.0
  %1355 = vmatprep.subr.mxu0 %v335
  %1356 = vmatpush1.msra.mxu0 %v332
  %1357 = vmatprep.subr.mxu0 %v207
  %1358 = vmatpush1.msra.mxu0 %v206
  %1359 = vmatprep.subr.mxu0 %v175
  %1360 = vmatpush1.msra.mxu0 %v174
  %1361 = vmatprep.subr.mxu0 %v143
  %1362 = vmatpush1.msra.mxu0 %v142
  %1363 = vmatprep.subr.mxu0 %v111
  %1364 = vmatpush1.msra.mxu0 %v110
  %1365 = vmatprep.subr.mxu0 %v79
  %1366 = vmatpush1.msra.mxu0 %v78
  %1367 = vmatprep.subr.mxu0 %v47
  %1368 = vmatpush1.msra.mxu0 %v46
  %1369 = vmatprep.subr.mxu0 0.0
  %1370 = vmatpush2.msra.mxu0 0.0
  %1371 = vmatprep.subr.mxu0 0.0
  %1372 = vmatpush2.msra.mxu0 0.0
  %1373 = vmatprep.subr.mxu0 0.0
  %1374 = vmatpush2.msra.mxu0 0.0
  %1375 = vmatprep.subr.mxu0 0.0
  %1376 = vmatpush2.msra.mxu0 0.0
  %1377 = vmatprep.subr.mxu0 0.0
  %1378 = vmatpush2.msra.mxu0 0.0
  %1379 = vmatprep.subr.mxu0 0.0
  %1380 = vmatpush2.msra.mxu0 0.0
  %1381 = vmatprep.subr.mxu0 0.0
  %1382 = vmatpush2.msra.mxu0 0.0
  %1383 = vmatprep.subr.mxu0 0.0
  %1384 = vmatpush2.msra.mxu0 0.0
  %1385 = vmatprep.subr.mxu0 0.0
  %1386 = vmatpush2.msra.mxu0 0.0
  %1387 = vmatprep.subr.mxu0 0.0
  %1388 = vmatpush2.msra.mxu0 0.0
  %1389 = vmatprep.subr.mxu0 0.0
  %1390 = vmatpush2.msra.mxu0 0.0
  %1391 = vmatprep.subr.mxu0 0.0
  %1392 = vmatpush2.msra.mxu0 0.0
  %1393 = vmatprep.subr.mxu0 0.0
  %1394 = vmatpush2.msra.mxu0 0.0
  %1395 = vmatprep.subr.mxu0 0.0
  %1396 = vmatpush2.msra.mxu0 0.0
  %1397 = vmatprep.subr.mxu0 0.0
  %1398 = vmatpush2.msra.mxu0 0.0
  %1399 = vmatprep.subr.mxu0 0.0
  %1400 = vmatpush2.msra.mxu0 0.0
  %1401 = vmatprep.mubr.f32.mxu0 0.0
  %1402 = vmatmul.mubr.f32.gmra.mxu0 %v244
  %v1403 = vpop.f32.mrf.mxu0
  %v1404 = vadd.f32 0.0, %v1403
  %v1405 = vpop.f32.mrf.mxu0
  %v1406 = vadd.f32 0.0, %v1405
  %1407 = vdwg.mxu0
  %1408 = vmatprep.subr.mxu0 0.0
  %1409 = vmatpush1.msra.mxu0 0.0
  %1410 = vmatprep.subr.mxu0 0.0
  %1411 = vmatpush1.msra.mxu0 0.0
  %1412 = vmatprep.subr.mxu0 0.0
  %1413 = vmatpush1.msra.mxu0 0.0
  %1414 = vmatprep.subr.mxu0 0.0
  %1415 = vmatpush1.msra.mxu0 0.0
  %1416 = vmatprep.subr.mxu0 0.0
  %1417 = vmatpush1.msra.mxu0 0.0
  %1418 = vmatprep.subr.mxu0 0.0
  %1419 = vmatpush1.msra.mxu0 0.0
  %1420 = vmatprep.subr.mxu0 0.0
  %1421 = vmatpush1.msra.mxu0 0.0
  %1422 = vmatprep.subr.mxu0 0.0
  %1423 = vmatpush1.msra.mxu0 0.0
  %1424 = vmatprep.subr.mxu0 0.0
  %1425 = vmatpush1.msra.mxu0 0.0
  %1426 = vmatprep.subr.mxu0 %v341
  %1427 = vmatpush1.msra.mxu0 %v338
  %1428 = vmatprep.subr.mxu0 %v209
  %1429 = vmatpush1.msra.mxu0 %v208
  %1430 = vmatprep.subr.mxu0 %v177
  %1431 = vmatpush1.msra.mxu0 %v176
  %1432 = vmatprep.subr.mxu0 %v145
  %1433 = vmatpush1.msra.mxu0 %v144
  %1434 = vmatprep.subr.mxu0 %v113
  %1435 = vmatpush1.msra.mxu0 %v112
  %1436 = vmatprep.subr.mxu0 %v81
  %1437 = vmatpush1.msra.mxu0 %v80
  %1438 = vmatprep.subr.mxu0 %v49
  %1439 = vmatpush1.msra.mxu0 %v48
  %1440 = vmatprep.subr.mxu0 0.0
  %1441 = vmatpush2.msra.mxu0 0.0
  %1442 = vmatprep.subr.mxu0 0.0
  %1443 = vmatpush2.msra.mxu0 0.0
  %1444 = vmatprep.subr.mxu0 0.0
  %1445 = vmatpush2.msra.mxu0 0.0
  %1446 = vmatprep.subr.mxu0 0.0
  %1447 = vmatpush2.msra.mxu0 0.0
  %1448 = vmatprep.subr.mxu0 0.0
  %1449 = vmatpush2.msra.mxu0 0.0
  %1450 = vmatprep.subr.mxu0 0.0
  %1451 = vmatpush2.msra.mxu0 0.0
  %1452 = vmatprep.subr.mxu0 0.0
  %1453 = vmatpush2.msra.mxu0 0.0
  %1454 = vmatprep.subr.mxu0 0.0
  %1455 = vmatpush2.msra.mxu0 0.0
  %1456 = vmatprep.subr.mxu0 0.0
  %1457 = vmatpush2.msra.mxu0 0.0
  %1458 = vmatprep.subr.mxu0 0.0
  %1459 = vmatpush2.msra.mxu0 0.0
  %1460 = vmatprep.subr.mxu0 0.0
  %1461 = vmatpush2.msra.mxu0 0.0
  %1462 = vmatprep.subr.mxu0 0.0
  %1463 = vmatpush2.msra.mxu0 0.0
  %1464 = vmatprep.subr.mxu0 0.0
  %1465 = vmatpush2.msra.mxu0 0.0
  %1466 = vmatprep.subr.mxu0 0.0
  %1467 = vmatpush2.msra.mxu0 0.0
  %1468 = vmatprep.subr.mxu0 0.0
  %1469 = vmatpush2.msra.mxu0 0.0
  %1470 = vmatprep.subr.mxu0 0.0
  %1471 = vmatpush2.msra.mxu0 0.0
  %1472 = vmatprep.mubr.f32.mxu0 0.0
  %1473 = vmatmul.mubr.f32.gmra.mxu0 %v244
  %v1474 = vpop.f32.mrf.mxu0
  %v1475 = vadd.f32 0.0, %v1474
  %v1476 = vpop.f32.mrf.mxu0
  %v1477 = vadd.f32 0.0, %v1476
  %1478 = vdwg.mxu0
  %v1479 = vadd.f32 %v410, %v412
  %v1480 = vadd.f32 %v1479, %v481
  %v1481 = vadd.f32 %v1480, %v483
  %v1482 = vadd.f32 %v1481, %v552
  %v1483 = vadd.f32 %v1482, %v554
  %v1484 = vadd.f32 %v1483, %v623
  %v1485 = vadd.f32 %v1484, %v625
  %v1486 = vadd.f32 %v1485, %v694
  %v1487 = vadd.f32 %v1486, %v696
  %v1488 = vadd.f32 %v1487, %v765
  %v1489 = vadd.f32 %v1488, %v767
  %v1490 = vadd.f32 %v1489, %v836
  %v1491 = vadd.f32 %v1490, %v838
  %v1492 = vadd.f32 %v1491, %v907
  %v1493 = vadd.f32 %v1492, %v909
  %v1494 = vadd.f32 %v1493, %v978
  %v1495 = vadd.f32 %v1494, %v980
  %v1496 = vadd.f32 %v1495, %v1049
  %v1497 = vadd.f32 %v1496, %v1051
  %v1498 = vadd.f32 %v1497, %v1120
  %v1499 = vadd.f32 %v1498, %v1122
  %v1500 = vadd.f32 %v1499, %v1191
  %v1501 = vadd.f32 %v1500, %v1193
  %v1502 = vadd.f32 %v1501, %v1262
  %v1503 = vadd.f32 %v1502, %v1264
  %v1504 = vadd.f32 %v1503, %v1333
  %v1505 = vadd.f32 %v1504, %v1335
  %v1506 = vadd.f32 %v1505, %v1404
  %v1507 = vadd.f32 %v1506, %v1406
  %v1508 = vadd.f32 %v1507, %v1475
  %v1509 = vadd.f32 %v1508, %v1477
  %1510 = vadd.xlane.f32.xlu0 %v1509
  %v1511 = vpop.xlane.xlu0 %1510
  %v1512 = vmul.f32 %v1511, 0.00024414063
  %v1513 = vmul.f32 %v410, %v410
  %v1514 = vmul.f32 %v412, %v412
  %v1515 = vmul.f32 %v481, %v481
  %v1516 = vmul.f32 %v483, %v483
  %v1517 = vmul.f32 %v552, %v552
  %v1518 = vmul.f32 %v554, %v554
  %v1519 = vmul.f32 %v623, %v623
  %v1520 = vmul.f32 %v625, %v625
  %v1521 = vmul.f32 %v694, %v694
  %v1522 = vmul.f32 %v696, %v696
  %v1523 = vmul.f32 %v765, %v765
  %v1524 = vmul.f32 %v767, %v767
  %v1525 = vmul.f32 %v836, %v836
  %v1526 = vmul.f32 %v838, %v838
  %v1527 = vmul.f32 %v907, %v907
  %v1528 = vmul.f32 %v909, %v909
  %v1529 = vmul.f32 %v978, %v978
  %v1530 = vmul.f32 %v980, %v980
  %v1531 = vmul.f32 %v1049, %v1049
  %v1532 = vmul.f32 %v1051, %v1051
  %v1533 = vmul.f32 %v1120, %v1120
  %v1534 = vmul.f32 %v1122, %v1122
  %v1535 = vmul.f32 %v1191, %v1191
  %v1536 = vmul.f32 %v1193, %v1193
  %v1537 = vmul.f32 %v1262, %v1262
  %v1538 = vmul.f32 %v1264, %v1264
  %v1539 = vmul.f32 %v1333, %v1333
  %v1540 = vmul.f32 %v1335, %v1335
  %v1541 = vmul.f32 %v1404, %v1404
  %v1542 = vmul.f32 %v1406, %v1406
  %v1543 = vmul.f32 %v1475, %v1475
  %v1544 = vmul.f32 %v1477, %v1477
  %v1545 = vadd.f32 %v1513, %v1514
  %v1546 = vadd.f32 %v1545, %v1515
  %v1547 = vadd.f32 %v1546, %v1516
  %v1548 = vadd.f32 %v1547, %v1517
  %v1549 = vadd.f32 %v1548, %v1518
  %v1550 = vadd.f32 %v1549, %v1519
  %v1551 = vadd.f32 %v1550, %v1520
  %v1552 = vadd.f32 %v1551, %v1521
  %v1553 = vadd.f32 %v1552, %v1522
  %v1554 = vadd.f32 %v1553, %v1523
  %v1555 = vadd.f32 %v1554, %v1524
  %v1556 = vadd.f32 %v1555, %v1525
  %v1557 = vadd.f32 %v1556, %v1526
  %v1558 = vadd.f32 %v1557, %v1527
  %v1559 = vadd.f32 %v1558, %v1528
  %v1560 = vadd.f32 %v1559, %v1529
  %v1561 = vadd.f32 %v1560, %v1530
  %v1562 = vadd.f32 %v1561, %v1531
  %v1563 = vadd.f32 %v1562, %v1532
  %v1564 = vadd.f32 %v1563, %v1533
  %v1565 = vadd.f32 %v1564, %v1534
  %v1566 = vadd.f32 %v1565, %v1535
  %v1567 = vadd.f32 %v1566, %v1536
  %v1568 = vadd.f32 %v1567, %v1537
  %v1569 = vadd.f32 %v1568, %v1538
  %v1570 = vadd.f32 %v1569, %v1539
  %v1571 = vadd.f32 %v1570, %v1540
  %v1572 = vadd.f32 %v1571, %v1541
  %v1573 = vadd.f32 %v1572, %v1542
  %v1574 = vadd.f32 %v1573, %v1543
  %v1575 = vadd.f32 %v1574, %v1544
  %1576 = vadd.xlane.f32.xlu0 %v1575
  %v1577 = vpop.xlane.xlu0 %1576
  %v1578 = vmul.f32 %v1577, 0.00024414063
  %v1579 = vmul.f32 %v1512, %v1512
  %v1580 = vsub.f32 %v1578, %v1579
  %v1581 = vadd.f32 %v1580, 1e-05
  %v1582 = vrsqrt.pop %v1581
  %v1583 = vld [vmem:[%s2] sm:$0xff]
  %v1584 = vmul.f32 %v1583, %v1582
  %v1585 = vld [vmem:[%s3] sm:$0xff]
  %v1586 = vmul.f32 %v1512, %v1584
  %v1587 = vsub.f32 %v1585, %v1586
  %1589 = vset.pattern.permute.xlu0 0
  %1590 = vperm.xlu0 %1589, %v1584
  %v1591 = vpop.permute.xlu0 %1590
  %v1593 = vmul.f32 %v410, %v1591
  %v1594 = vmul.f32 %v412, %v1591
  %v1595 = vmul.f32 %v481, %v1591
  %v1596 = vmul.f32 %v483, %v1591
  %v1597 = vmul.f32 %v552, %v1591
  %v1598 = vmul.f32 %v554, %v1591
  %v1599 = vmul.f32 %v623, %v1591
  %v1600 = vmul.f32 %v625, %v1591
  %v1601 = vmul.f32 %v694, %v1591
  %v1602 = vmul.f32 %v696, %v1591
  %v1603 = vmul.f32 %v765, %v1591
  %v1604 = vmul.f32 %v767, %v1591
  %v1605 = vmul.f32 %v836, %v1591
  %v1606 = vmul.f32 %v838, %v1591
  %v1607 = vmul.f32 %v907, %v1591
  %v1608 = vmul.f32 %v909, %v1591
  %v1609 = vmul.f32 %v978, %v1591
  %v1610 = vmul.f32 %v980, %v1591
  %v1611 = vmul.f32 %v1049, %v1591
  %v1612 = vmul.f32 %v1051, %v1591
  %v1613 = vmul.f32 %v1120, %v1591
  %v1614 = vmul.f32 %v1122, %v1591
  %v1615 = vmul.f32 %v1191, %v1591
  %v1616 = vmul.f32 %v1193, %v1591
  %v1617 = vmul.f32 %v1262, %v1591
  %v1618 = vmul.f32 %v1264, %v1591
  %v1619 = vmul.f32 %v1333, %v1591
  %v1620 = vmul.f32 %v1335, %v1591
  %v1621 = vmul.f32 %v1404, %v1591
  %v1622 = vmul.f32 %v1406, %v1591
  %v1623 = vmul.f32 %v1475, %v1591
  %v1624 = vmul.f32 %v1477, %v1591
  %1626 = vset.pattern.permute.xlu0 0
  %1627 = vperm.xlu0 %1626, %v1587
  %v1628 = vpop.permute.xlu0 %1627
  %v1630 = vadd.f32 %v1593, %v1628
  %v1631 = vadd.f32 %v1594, %v1628
  %v1632 = vadd.f32 %v1595, %v1628
  %v1633 = vadd.f32 %v1596, %v1628
  %v1634 = vadd.f32 %v1597, %v1628
  %v1635 = vadd.f32 %v1598, %v1628
  %v1636 = vadd.f32 %v1599, %v1628
  %v1637 = vadd.f32 %v1600, %v1628
  %v1638 = vadd.f32 %v1601, %v1628
  %v1639 = vadd.f32 %v1602, %v1628
  %v1640 = vadd.f32 %v1603, %v1628
  %v1641 = vadd.f32 %v1604, %v1628
  %v1642 = vadd.f32 %v1605, %v1628
  %v1643 = vadd.f32 %v1606, %v1628
  %v1644 = vadd.f32 %v1607, %v1628
  %v1645 = vadd.f32 %v1608, %v1628
  %v1646 = vadd.f32 %v1609, %v1628
  %v1647 = vadd.f32 %v1610, %v1628
  %v1648 = vadd.f32 %v1611, %v1628
  %v1649 = vadd.f32 %v1612, %v1628
  %v1650 = vadd.f32 %v1613, %v1628
  %v1651 = vadd.f32 %v1614, %v1628
  %v1652 = vadd.f32 %v1615, %v1628
  %v1653 = vadd.f32 %v1616, %v1628
  %v1654 = vadd.f32 %v1617, %v1628
  %v1655 = vadd.f32 %v1618, %v1628
  %v1656 = vadd.f32 %v1619, %v1628
  %v1657 = vadd.f32 %v1620, %v1628
  %v1658 = vadd.f32 %v1621, %v1628
  %v1659 = vadd.f32 %v1622, %v1628
  %v1660 = vadd.f32 %v1623, %v1628
  %v1661 = vadd.f32 %v1624, %v1628
  %1662 = vst [vmem:[%s4] sm:$0xff] %v1630
  %1663 = vst [vmem:[%s4 + $0x8] sm:$0xff] %v1631
  %1664 = vst [vmem:[%s4 + $0x10] sm:$0xff] %v1632
  %1665 = vst [vmem:[%s4 + $0x18] sm:$0xff] %v1633
  %1666 = vst [vmem:[%s4 + $0x20] sm:$0xff] %v1634
  %1667 = vst [vmem:[%s4 + $0x28] sm:$0xff] %v1635
  %1668 = vst [vmem:[%s4 + $0x30] sm:$0xff] %v1636
  %1669 = vst [vmem:[%s4 + $0x38] sm:$0xff] %v1637
  %1670 = vst [vmem:[%s4 + $0x40] sm:$0xff] %v1638
  %1671 = vst [vmem:[%s4 + $0x48] sm:$0xff] %v1639
  %1672 = vst [vmem:[%s4 + $0x50] sm:$0xff] %v1640
  %1673 = vst [vmem:[%s4 + $0x58] sm:$0xff] %v1641
  %1674 = vst [vmem:[%s4 + $0x60] sm:$0xff] %v1642
  %1675 = vst [vmem:[%s4 + $0x68] sm:$0xff] %v1643
  %1676 = vst [vmem:[%s4 + $0x70] sm:$0xff] %v1644
  %1677 = vst [vmem:[%s4 + $0x78] sm:$0xff] %v1645
  %1678 = vst [vmem:[%s4 + $0x80] sm:$0xff] %v1646
  %1679 = vst [vmem:[%s4 + $0x88] sm:$0xff] %v1647
  %1680 = vst [vmem:[%s4 + $0x90] sm:$0xff] %v1648
  %1681 = vst [vmem:[%s4 + $0x98] sm:$0xff] %v1649
  %1682 = vst [vmem:[%s4 + $0xa0] sm:$0xff] %v1650
  %1683 = vst [vmem:[%s4 + $0xa8] sm:$0xff] %v1651
  %1684 = vst [vmem:[%s4 + $0xb0] sm:$0xff] %v1652
  %1685 = vst [vmem:[%s4 + $0xb8] sm:$0xff] %v1653
  %1686 = vst [vmem:[%s4 + $0xc0] sm:$0xff] %v1654
  %1687 = vst [vmem:[%s4 + $0xc8] sm:$0xff] %v1655
  %1688 = vst [vmem:[%s4 + $0xd0] sm:$0xff] %v1656
  %1689 = vst [vmem:[%s4 + $0xd8] sm:$0xff] %v1657
  %1690 = vst [vmem:[%s4 + $0xe0] sm:$0xff] %v1658
  %1691 = vst [vmem:[%s4 + $0xe8] sm:$0xff] %v1659
  %1692 = vst [vmem:[%s4 + $0xf0] sm:$0xff] %v1660
  %1693 = vst [vmem:[%s4 + $0xf8] sm:$0xff] %v1661
  // Predicated region
  $region18: #{model_forward.1} parent=0 // pred_check
    _
  $region19: #{model_forward.1} parent=0 // pred_check_branch
    %1695 = sbr.rel (0) target = $region21
  $region20: #{model_forward.1} parent=0 // pred_region
    _
  $region21: #{model_forward.1} parent=0 // pred_fallthru
    _
  // Predicated region
  $region22: #{model_forward.1} parent=0 // pred_check
    _
  $region23: #{model_forward.1} parent=0 // pred_check_branch
    %1697 = sbr.rel (0) target = $region25
  $region24: #{model_forward.1} parent=0 // pred_region
    _
  $region25: #{model_forward.1} parent=0 // pred_fallthru
    _

</llo_original>
